<compile_context>
chip_gen: v6e
topology: v6e:2x2x1
jax: 0.10.0
libtpu: 0.0.40
codegen_flags: <defaults>
</compile_context>

<pallas_src>
import functools
from typing import List, Tuple

import jax
import jax.numpy as jnp
import numpy as np
from jax.experimental import pallas as pl
from jax.experimental.pallas import tpu as pltpu


# ----------------------------------------------------------------------------
# Part 1: MinHash + Bloom text encoding (plain Python, non-differentiable glue)
# ----------------------------------------------------------------------------
def _character_ngrams(text: str, ngram_range: Tuple[int, int]) -> List[str]:
    min_n, max_n = ngram_range
    padded = f"<{text}>"
    out = []
    for n in range(min_n, max_n + 1):
        for i in range(len(padded) - n + 1):
            out.append(padded[i:i + n])
    return out


def _fnv1a_hash(s: str, seed: int) -> int:
    # Deterministic 32-bit hash (stand-in for mmh3.hash).
    h = (seed ^ 0x811C9DC5) & 0xFFFFFFFF
    for byte in s.encode("utf-8"):
        h ^= byte
        h = (h * 0x01000193) & 0xFFFFFFFF
    return h


def batch_minhash_bloom(texts: List[str],
                        seeds: np.ndarray,
                        bloom_filter_size: int,
                        ngram_range: Tuple[int, int]) -> np.ndarray:
    """Returns int8 [B, bloom_filter_size] bloom vectors (bits are 0/1).

    int8 output is intentional: the Pallas kernel streams x as int8 and casts
    on-chip, so no host-side f32->bf16 cast pass is ever needed.
    """
    vecs = np.zeros((len(texts), bloom_filter_size), dtype=np.int8)
    for b, text in enumerate(texts):
        ngrams = _character_ngrams(text, ngram_range)
        if not ngrams:
            continue
        for ngram in ngrams:
            for seed in seeds:
                idx = _fnv1a_hash(ngram, int(seed)) % bloom_filter_size
                vecs[b, idx] = 1
    return vecs


# ----------------------------------------------------------------------------
# Part 2: fused Linear + Dropout(eval) + LayerNorm Pallas kernels
# ----------------------------------------------------------------------------
def _layer_norm_epilogue(h, affine, eps):
    """h: (TM, N) f32 pre-bias activations; affine rows = [bias, gamma, beta]."""
    bias = affine[0:1, :]
    gamma = affine[1:2, :]
    beta = affine[2:3, :]
    h = h + bias
    # Dropout in eval mode == identity.
    # Two-pass (centered) variance — matches PyTorch LayerNorm numerics.
    mean = jnp.mean(h, axis=-1, keepdims=True)
    centered = h - mean
    var = jnp.mean(centered * centered, axis=-1, keepdims=True)
    return centered * jax.lax.rsqrt(var + eps) * gamma + beta


def _proj_ln_resident_kernel(x_ref, w_ref, affine_ref, o_ref, *, eps):
    """Fast path, grid = (row_tiles,).  Whole weight is VMEM-resident.

    x_ref:      (TM, K)  int8   bloom bits
    w_ref:      (K, N)   bf16   constant index_map -> fetched from HBM once
    affine_ref: (3, N)   f32    rows = [bias, gamma, beta]
    o_ref:      (TM, N)  f32
    """
    h = jnp.dot(x_ref[...].astype(w_ref.dtype), w_ref[...],
                preferred_element_type=jnp.float32)
    o_ref[...] = _layer_norm_epilogue(h, affine_ref[...], eps).astype(o_ref.dtype)


def _proj_ln_ktiled_kernel(x_ref, w_ref, affine_ref, o_ref, *, eps):
    """Fallback, grid = (row_tiles, k_tiles), k last / 'arbitrary'.

    The output block index (i, 0) is constant across k, so o_ref itself is the
    VMEM-resident f32 accumulator (no scratch buffer, no extra copy).
    """
    k = pl.program_id(1)

    @pl.when(k == 0)
    def _():
        o_ref[...] = jnp.zeros_like(o_ref)

    o_ref[...] += jnp.dot(x_ref[...].astype(w_ref.dtype), w_ref[...],
                          preferred_element_type=jnp.float32)

    @pl.when(k == pl.num_programs(1) - 1)
    def _():
        o_ref[...] = _layer_norm_epilogue(
            o_ref[...], affine_ref[...], eps).astype(o_ref.dtype)


# ----------------------------------------------------------------------------
# Wrapper
# ----------------------------------------------------------------------------
def prepare_projection_params(weight, bias, gamma, beta, *,
                              weight_dtype=jnp.bfloat16):
    """ONE-TIME parameter prep (do NOT call per forward pass).

    weight: PyTorch Linear layout [output_dim, bloom_size]; transposed to
    [K, N] and cast to `weight_dtype` once.  NOTE: bf16 weights change the
    matmul numerics vs the f32 PyTorch module (x is exactly 0/1 so x's dtype
    is lossless); pass weight_dtype=jnp.float32 to keep full precision.
    bias/gamma/beta are merged into a single (3, N) f32 operand (one DMA).
    """
    w_t = jnp.asarray(weight, jnp.float32).T.astype(weight_dtype)
    affine = jnp.stack([jnp.asarray(bias).reshape(-1),
                        jnp.asarray(gamma).reshape(-1),
                        jnp.asarray(beta).reshape(-1)], axis=0).astype(jnp.float32)
    return w_t, affine


def _vmem_capacity_bytes():
    try:
        return int(pltpu.get_tpu_info().vmem_capacity_bytes)
    except Exception:
        return 64 << 20          # v7x per-core physical; conservative fallback


def _vmem_limit_bytes(footprint, cap):
    # Computed footprint x2 plus margin, never below 32 MiB, capped below the
    # physical per-core capacity (64 MiB on v7x, 128 MiB on v5e/v6e).
    return int(min(max(2 * footprint + (8 << 20), 32 << 20), int(0.9 * cap)))


def _pick_tk(K, tk_max):
    for cand in (tk_max, 2048, 1024, 512, 256, 128):
        if 128 <= cand <= tk_max and K % cand == 0:
            return cand
    return K                      # no clean divisor: single K step


def minhash_bloom_projection(x, w_t, affine, *, eps=1e-5, tm=256, tk_max=1024,
                             resident_weight_bytes_max=None,
                             core_parallel_rows=False):
    """Fused Linear(bloom -> N) + Dropout(eval) + LayerNorm.

    x:      [B, K] int8 bloom vectors (values 0/1).
    w_t:    [K, N] weight, already transposed + cast (prepare_projection_params).
    affine: [3, N] f32, rows = [bias, gamma, beta].
    Returns [B, N] f32.
    """
    if x.dtype != jnp.int8:
        x = x.astype(jnp.int8)    # lossless: bloom bits are exactly 0/1
    B, K = x.shape
    K2, N = w_t.shape
    assert K == K2 and affine.shape == (3, N)

    # Row tiling; pad the batch only if needed (int8, cheap; sliced off below).
    tm = min(tm, 128 * pl.cdiv(B, 128))
    bp = tm * pl.cdiv(B, tm)
    if bp != B:
        x = jnp.pad(x, ((0, bp - B), (0, 0)))

    cap = _vmem_capacity_bytes()
    if resident_weight_bytes_max is None:
        # ~16 MiB on v7x (64 MiB physical), ~32 MiB on v5e/v6e (128 MiB).
        resident_weight_bytes_max = cap // 4
    weight_bytes = K * N * jnp.dtype(w_t.dtype).itemsize
    w_itemsize = jnp.dtype(w_t.dtype).itemsize

    row_sem = pltpu.CORE_PARALLEL if core_parallel_rows else "parallel"

    if weight_bytes <= resident_weight_bytes_max:
        # --- Fast path: whole weight VMEM-resident (one HBM pass per call) ---
        footprint = (2 * tm * K                    # x int8, double-buffered
                     + 2 * K * N * w_itemsize      # weight (constant index)
                     + 2 * 3 * N * 4               # affine
                     + 2 * tm * N * 4)             # output
        out = pl.pallas_call(
            functools.partial(_proj_ln_resident_kernel, eps=eps),
            out_shape=jax.ShapeDtypeStruct((bp, N), jnp.float32),
            grid_spec=pltpu.PrefetchScalarGridSpec(
                num_scalar_prefetch=0,
                grid=(bp // tm,),
                in_specs=[
                    pl.BlockSpec((tm, K), lambda i: (i, 0)),   # x row tile
                    pl.BlockSpec((K, N), lambda i: (0, 0)),    # full weight
                    pl.BlockSpec((3, N), lambda i: (0, 0)),    # bias/gamma/beta
                ],
                out_specs=pl.BlockSpec((tm, N), lambda i: (i, 0)),
            ),
            compiler_params=pltpu.CompilerParams(
                dimension_semantics=(row_sem,),
                vmem_limit_bytes=_vmem_limit_bytes(footprint, cap)),
        )(x, w_t, affine)
    else:
        # --- Fallback: K (bloom size) is a grid reduction axis ('arbitrary') ---
        tk = _pick_tk(K, tk_max)
        footprint = (2 * tm * tk
                     + 2 * tk * N * w_itemsize
                     + 2 * 3 * N * 4
                     + 2 * tm * N * 4)
        out = pl.pallas_call(
            functools.partial(_proj_ln_ktiled_kernel, eps=eps),
            out_shape=jax.ShapeDtypeStruct((bp, N), jnp.float32),
            grid_spec=pltpu.PrefetchScalarGridSpec(
                num_scalar_prefetch=0,
                grid=(bp // tm, K // tk),                      # reduction last
                in_specs=[
                    pl.BlockSpec((tm, tk), lambda i, k: (i, k)),
                    pl.BlockSpec((tk, N), lambda i, k: (k, 0)),
                    pl.BlockSpec((3, N), lambda i, k: (0, 0)),
                ],
                out_specs=pl.BlockSpec((tm, N), lambda i, k: (i, 0)),
            ),
            compiler_params=pltpu.CompilerParams(
                dimension_semantics=(row_sem, "arbitrary"),
                vmem_limit_bytes=_vmem_limit_bytes(footprint, cap)),
        )(x, w_t, affine)

    return out if bp == B else out[:B]


# ----------------------------------------------------------------------------
# Driver
# ----------------------------------------------------------------------------
if __name__ == "__main__":
    # Module hyper-parameters (scaled down for a quick test).
    output_dim = 256
    minhash_permutations = 16        # fewer permutations -> fast Python encode
    bloom_filter_size = 512
    ngram_range = (2, 4)

    # Deterministic MinHash seeds (as in __init__, but reproducible).
    rng = np.random.RandomState(0)
    minhash_seeds = rng.randint(0, 2**31 - 1, size=minhash_permutations,
                                dtype=np.int64)

    # Deterministic parameters (nn.Linear + nn.LayerNorm shapes).
    key = jax.random.PRNGKey(0)
    kw, kb = jax.random.split(key)
    bound = 1.0 / np.sqrt(bloom_filter_size)
    weight = jax.random.uniform(kw, (output_dim, bloom_filter_size),
                                minval=-bound, maxval=bound, dtype=jnp.float32)
    bias = jax.random.uniform(kb, (output_dim,),
                              minval=-bound, maxval=bound, dtype=jnp.float32)
    gamma = jnp.ones((output_dim,), jnp.float32)     # LayerNorm default init
    beta = jnp.zeros((output_dim,), jnp.float32)

    # One-time parameter preparation (transpose / bf16 cast / affine stack).
    w_t, affine = prepare_projection_params(weight, bias, gamma, beta)

    # Small batch of example texts, tiled so the grid has multiple row tiles.
    texts = [
        "hello world", "pallas tpu kernel", "minhash bloom", "projection",
        "neural network", "jax is fun", "tensor core", "layer norm",
    ]
    bloom_np = batch_minhash_bloom(texts, minhash_seeds,
                                   bloom_filter_size, ngram_range)
    bloom_np = np.tile(bloom_np, (64, 1))            # [512, 512] int8
    x = jnp.asarray(bloom_np)                        # int8, no per-call cast

    # Fast path (whole weight VMEM-resident), 2 row tiles at tm=256.
    out = jax.block_until_ready(
        minhash_bloom_projection(x, w_t, affine, tm=256))

    # K-tiled fallback path (forced), exercises the grid-reduction accumulator.
    out_kt = jax.block_until_ready(
        minhash_bloom_projection(x, w_t, affine, tm=256, tk_max=256,
                                 resident_weight_bytes_max=0))

    # Reference in plain JAX (same bf16-rounded weight as the kernel, f32 math:
    # Linear -> eval dropout -> LayerNorm).
    x_f = x.astype(jnp.float32)
    w_f = w_t.astype(jnp.float32)
    h_ref = x_f @ w_f + bias
    mu = h_ref.mean(-1, keepdims=True)
    var = ((h_ref - mu) ** 2).mean(-1, keepdims=True)
    ref = (h_ref - mu) / jnp.sqrt(var + 1e-5) * gamma + beta

    np.testing.assert_allclose(np.asarray(out), np.asarray(ref),
                               rtol=1e-3, atol=1e-3)
    np.testing.assert_allclose(np.asarray(out_kt), np.asarray(ref),
                               rtol=1e-3, atol=1e-3)
    assert out.shape == (x.shape[0], output_dim)
    print("KERNEL_OK")
</pallas_src>

<mosaic_0001>
module attributes {stable_mosaic.version = 11 : i64} {
  func.func @_proj_ln_resident_kernel(%arg0: i32, %arg1: memref<256x512xi8, #tpu.memory_space<vmem>>, %arg2: memref<512x256xbf16, #tpu.memory_space<vmem>>, %arg3: memref<3x256xf32, #tpu.memory_space<vmem>>, %arg4: memref<256x256xf32, #tpu.memory_space<vmem>>) attributes {dimension_semantics = [#tpu.dimension_semantics<parallel>], iteration_bounds = array<i64: 2>, scalar_prefetch = 0 : i64, scratch_operands = 0 : i64, tpu.core_type = #tpu.core_type<tc>, window_params = [{transform_indices = @transform_0, window_bounds = array<i64: 256, 512>}, {pipeline_mode = #tpu.pipeline_mode<synchronous>, transform_indices = @transform_1, window_bounds = array<i64: 512, 256>}, {pipeline_mode = #tpu.pipeline_mode<synchronous>, transform_indices = @transform_2, window_bounds = array<i64: 3, 256>}, {transform_indices = @transform_3, window_bounds = array<i64: 256, 256>}]} {
    %c0 = arith.constant 0 : index
    %c0_0 = arith.constant 0 : index
    %0 = vector.load %arg1[%c0, %c0_0] : memref<256x512xi8, #tpu.memory_space<vmem>>, vector<256x512xi8>
    %1 = arith.sitofp %0 : vector<256x512xi8> to vector<256x512xbf16>
    %c0_1 = arith.constant 0 : index
    %c0_2 = arith.constant 0 : index
    %2 = vector.load %arg2[%c0_1, %c0_2] : memref<512x256xbf16, #tpu.memory_space<vmem>>, vector<512x256xbf16>
    %cst = arith.constant dense<0.000000e+00> : vector<256x256xf32>
    %3 = tpu.matmul %1, %2, %cst {dimension_numbers = #tpu.dot_dimension_numbers<[1], [0], [0], [1], [0, 0, 1, 1], [], []>} : vector<256x512xbf16>, vector<512x256xbf16>, vector<256x256xf32> -> vector<256x256xf32>
    %c0_3 = arith.constant 0 : index
    %c0_4 = arith.constant 0 : index
    %4 = vector.load %arg3[%c0_3, %c0_4] : memref<3x256xf32, #tpu.memory_space<vmem>>, vector<3x256xf32>
    %5 = vector.extract_strided_slice %4 {offsets = [0, 0], sizes = [1, 256], strides = [1, 1]} : vector<3x256xf32> to vector<1x256xf32>
    %6 = vector.extract_strided_slice %4 {offsets = [1, 0], sizes = [1, 256], strides = [1, 1]} : vector<3x256xf32> to vector<1x256xf32>
    %7 = vector.extract_strided_slice %4 {offsets = [2, 0], sizes = [1, 256], strides = [1, 1]} : vector<3x256xf32> to vector<1x256xf32>
    %8 = vector.broadcast %5 : vector<1x256xf32> to vector<256x256xf32>
    %9 = arith.addf %3, %8 : vector<256x256xf32>
    %cst_5 = arith.constant dense<0.000000e+00> : vector<256xf32>
    %10 = vector.multi_reduction <add>, %9, %cst_5 [1] : vector<256x256xf32> to vector<256xf32>
    %11 = vector.shape_cast %10 : vector<256xf32> to vector<256x1xf32>
    %cst_6 = arith.constant 2.560000e+02 : f32
    %12 = vector.broadcast %cst_6 : f32 to vector<256x1xf32>
    %13 = arith.divf %11, %12 : vector<256x1xf32>
    %14 = vector.broadcast %13 : vector<256x1xf32> to vector<256x256xf32>
    %15 = arith.subf %9, %14 : vector<256x256xf32>
    %16 = arith.mulf %15, %15 : vector<256x256xf32>
    %cst_7 = arith.constant dense<0.000000e+00> : vector<256xf32>
    %17 = vector.multi_reduction <add>, %16, %cst_7 [1] : vector<256x256xf32> to vector<256xf32>
    %18 = vector.shape_cast %17 : vector<256xf32> to vector<256x1xf32>
    %cst_8 = arith.constant 2.560000e+02 : f32
    %19 = vector.broadcast %cst_8 : f32 to vector<256x1xf32>
    %20 = arith.divf %18, %19 : vector<256x1xf32>
    %cst_9 = arith.constant 9.99999974E-6 : f32
    %21 = vector.broadcast %cst_9 : f32 to vector<256x1xf32>
    %22 = arith.addf %20, %21 : vector<256x1xf32>
    %23 = math.rsqrt %22 : vector<256x1xf32>
    %24 = vector.broadcast %23 : vector<256x1xf32> to vector<256x256xf32>
    %25 = arith.mulf %15, %24 : vector<256x256xf32>
    %26 = vector.broadcast %6 : vector<1x256xf32> to vector<256x256xf32>
    %27 = arith.mulf %25, %26 : vector<256x256xf32>
    %28 = vector.broadcast %7 : vector<1x256xf32> to vector<256x256xf32>
    %29 = arith.addf %27, %28 : vector<256x256xf32>
    %c0_10 = arith.constant 0 : index
    %c0_11 = arith.constant 0 : index
    %30 = vector.load %arg4[%c0_10, %c0_11] : memref<256x256xf32, #tpu.memory_space<vmem>>, vector<256x256xf32>
    tpu.vector_store %arg4[%c0_10, %c0_11], %29 {strides = array<i32>} : memref<256x256xf32, #tpu.memory_space<vmem>>, vector<256x256xf32>,
    return
  }
  func.func @transform_0(%arg0: i32) -> (i32, i32) {
    %c0_i32 = arith.constant 0 : i32
    %c0_i32_0 = arith.constant 0 : i32
    return %arg0, %c0_i32 : i32, i32
  }
  func.func @transform_1(%arg0: i32) -> (i32, i32) {
    %c0_i32 = arith.constant 0 : i32
    %c0_i32_0 = arith.constant 0 : i32
    %c0_i32_1 = arith.constant 0 : i32
    return %c0_i32, %c0_i32_0 : i32, i32
  }
  func.func @transform_2(%arg0: i32) -> (i32, i32) {
    %c0_i32 = arith.constant 0 : i32
    %c0_i32_0 = arith.constant 0 : i32
    %c0_i32_1 = arith.constant 0 : i32
    return %c0_i32, %c0_i32_0 : i32, i32
  }
  func.func @transform_3(%arg0: i32) -> (i32, i32) {
    %c0_i32 = arith.constant 0 : i32
    %c0_i32_0 = arith.constant 0 : i32
    return %arg0, %c0_i32 : i32, i32
  }
}

</mosaic_0001>

<llo_original>
// kernel: tpu_custom_call.1
$region0: #{tpu_custom_call.1}
  #allocation0 [shape = 'u32[]', space=smem, size = 0x4, offset = 0x4, fixed_abs, tag = 'smem constant byte address 0x4 - core index']
  #allocation1 [shape = 'u32[144,128]{1,0:T(1,128)}', space=vmem, size = 0x12000, scoped, tag = 'internal scratch']
  %s0 = inlined_call_operand.hbm [shape: s8[512,512], index: 0, kind: input, shape index: {}]
  %s1 = inlined_call_operand.hbm [shape: bf16[512,256], index: 1, kind: input, shape index: {}]
  %s2 = inlined_call_operand.hbm [shape: f32[3,256], index: 2, kind: input, shape index: {}]
  %s3 = inlined_call_operand.hbm [shape: f32[512,256], index: 3, kind: output, shape index: {}]
  %s4 = sld [smem:[#allocation0]]
  $region57: #{tpu_custom_call.1} parent=0
    _
  %s6 = ssub.s32 1, %s4
  %s7 = scalar_select 0, %s6, %s4
  $region1: #{tpu_custom_call.1} parent=0
    #allocation2 [shape = 'u8[262144]{0}', space=vmem, size = 0x40000, scoped, tag = 'input window, operand 0']
    #allocation3 [shape = 's32[2]{0}', space=sflag, size = 0x8, scoped, tag = 'scoped memory for tpu_custom_call.1']
    #allocation4 [shape = 's32[2]{0}', space=sflag, size = 0x8, scoped, tag = 'scoped memory for tpu_custom_call.1']
    #allocation5 [shape = 'u8[262144]{0}', space=vmem, size = 0x40000, scoped, tag = 'input window, operand 1, single buffered']
    #allocation6 [shape = 's32[1]{0}', space=sflag, size = 0x4, scoped, tag = 'scoped memory for tpu_custom_call.1']
    #allocation7 [shape = 'u8[4096]{0}', space=vmem, size = 0x1000, scoped, tag = 'input window, operand 2, single buffered']
    #allocation8 [shape = 'u8[524288]{0}', space=vmem, size = 0x80000, scoped, tag = 'output window, operand 0']
    %8 = vsyncpa [#allocation3], 0
    %s9 = scalar_lea.sflag [#allocation3], 1
    %10 = vsyncpa %s9, 0
    %11 = vsyncpa [#allocation6], 0
    %12 = vsyncpa [#allocation4], 0
    %s13 = scalar_lea.sflag [#allocation4], 1
    %14 = vsyncpa %s13, 0
    loop: start=0, step=1, limit=4
    $region2: #{tpu_custom_call.1} parent=1 // loop_pre_header
      _
    $region3: #{tpu_custom_call.1} parent=1 // loop_header
      %s16 = sphi 0, %s20
      %p17 = scmp.ge.s32.totalorder %s16, 4
      %s26 = sphi 0, %s28
      %s29 = sphi 0, %s26
      %s30 = sphi 0, %s29
      %s46 = sphi 0, %s30
      %s50 = sphi 0, %s50
      %s52 = sphi 0, %s50
      %s53 = sphi 0, %s52
      %s67 = sphi 0, %s53
      %s71 = sphi 0, %s71
      %s73 = sphi 0, %s71
      %s74 = sphi 0, %s73
      %s88 = sphi 0, %s74
      %s94 = sphi 0, %s96
      %s97 = sphi 0, %s94
      %s98 = sphi 0, %s97
      %s114 = sphi 0, %s98
    $region4: #{tpu_custom_call.1} parent=1 // loop_header_branch
      %19 = sbr.rel (%p17) target = $region8
    $region5: #{tpu_custom_call.1} parent=1 // loop_body
      %s21 = ssub.s32 %s16, 1
      %s22 = ssub.s32 %s16, 2
      %s23 = sadd.s32 %s16, 1
      %s24 = ssub.s32 %s16, %s23
      %p25 = scmp.eq.s32.totalorder %s24, 0
      %s27 = sadd.s32 %s26, 1
      %s28 = scalar_select %p25, %s26, %s27
      %p31 = pneg %p25
      %p32 = scmp.eq.s32.totalorder %s16, 1
      %p33 = por %p31, %p32
      %p34 = scmp.ne.s32.totalorder %s26, %s29
      %p35 = scmp.eq.s32.totalorder %s16, 0
      %p36 = por %p34, %p35
      %p37 = scmp.ne.s32.totalorder %s26, %s29
      %p38 = scmp.eq.s32.totalorder %s21, 1
      %p39 = por %p37, %p38
      %p40 = scmp.ne.s32.totalorder %s29, %s30
      %p41 = scmp.eq.s32.totalorder %s21, 0
      %p42 = por %p40, %p41
      %p43 = scmp.ne.s32.totalorder %s29, %s30
      %p44 = scmp.eq.s32.totalorder %s22, 1
      %p45 = por %p43, %p44
      %p47 = scmp.ne.s32.totalorder %s30, %s46
      %p48 = scmp.eq.s32.totalorder %s22, 0
      %p49 = por %p47, %p48
      %s51 = sadd.s32 %s50, 1
      %p54 = scmp.eq.s32.totalorder %s16, 1
      %p55 = scmp.ne.s32.totalorder %s50, %s52
      %p56 = scmp.eq.s32.totalorder %s16, 0
      %p57 = por %p55, %p56
      %p58 = scmp.ne.s32.totalorder %s50, %s52
      %p59 = scmp.eq.s32.totalorder %s21, 1
      %p60 = por %p58, %p59
      %p61 = scmp.ne.s32.totalorder %s52, %s53
      %p62 = scmp.eq.s32.totalorder %s21, 0
      %p63 = por %p61, %p62
      %p64 = scmp.ne.s32.totalorder %s52, %s53
      %p65 = scmp.eq.s32.totalorder %s22, 1
      %p66 = por %p64, %p65
      %p68 = scmp.ne.s32.totalorder %s53, %s67
      %p69 = scmp.eq.s32.totalorder %s22, 0
      %p70 = por %p68, %p69
      %s72 = sadd.s32 %s71, 1
      %p75 = scmp.eq.s32.totalorder %s16, 1
      %p76 = scmp.ne.s32.totalorder %s71, %s73
      %p77 = scmp.eq.s32.totalorder %s16, 0
      %p78 = por %p76, %p77
      %p79 = scmp.ne.s32.totalorder %s71, %s73
      %p80 = scmp.eq.s32.totalorder %s21, 1
      %p81 = por %p79, %p80
      %p82 = scmp.ne.s32.totalorder %s73, %s74
      %p83 = scmp.eq.s32.totalorder %s21, 0
      %p84 = por %p82, %p83
      %p85 = scmp.ne.s32.totalorder %s73, %s74
      %p86 = scmp.eq.s32.totalorder %s22, 1
      %p87 = por %p85, %p86
      %p89 = scmp.ne.s32.totalorder %s74, %s88
      %p90 = scmp.eq.s32.totalorder %s22, 0
      %p91 = por %p89, %p90
      %s92 = ssub.s32 %s16, %s23
      %p93 = scmp.eq.s32.totalorder %s92, 0
      %s95 = sadd.s32 %s94, 1
      %s96 = scalar_select %p93, %s94, %s95
      %p99 = pneg %p93
      %p100 = scmp.eq.s32.totalorder %s16, 1
      %p101 = por %p99, %p100
      %p102 = scmp.ne.s32.totalorder %s94, %s97
      %p103 = scmp.eq.s32.totalorder %s16, 0
      %p104 = por %p102, %p103
      %p105 = scmp.ne.s32.totalorder %s94, %s97
      %p106 = scmp.eq.s32.totalorder %s21, 1
      %p107 = por %p105, %p106
      %p108 = scmp.ne.s32.totalorder %s97, %s98
      %p109 = scmp.eq.s32.totalorder %s21, 0
      %p110 = por %p108, %p109
      %p111 = scmp.ne.s32.totalorder %s97, %s98
      %p112 = scmp.eq.s32.totalorder %s22, 1
      %p113 = por %p111, %p112
      %p115 = scmp.ne.s32.totalorder %s98, %s114
      %p116 = scmp.eq.s32.totalorder %s22, 0
      %p117 = por %p115, %p116
      %p118 = scmp.le.s32.totalorder 1, %s16
      %p119 = scmp.lt.s32.totalorder %s16, 3
      %p120 = pnand %p118, %p119
      %p121 = pneg %p120
      // Predicated region
      $region9: #{tpu_custom_call.1} parent=5 // pred_check
        _
      $region10: #{tpu_custom_call.1} parent=5 // pred_check_branch
        %123 = sbr.rel (%p120) target = $region12
      $region11: #{tpu_custom_call.1} parent=5 // pred_region
        %s124 = ssub.s32 %s16, 1
        // Predicated region
        $region13: #{tpu_custom_call.1} parent=11 // pred_check
          %p125 = pneg %p63
        $region14: #{tpu_custom_call.1} parent=11 // pred_check_branch
          %127 = sbr.rel (%p125) target = $region16
        $region15: #{tpu_custom_call.1} parent=11 // pred_region
          %s129 = ssub.s32 8192, 8192
          %130 = vsyncadd [#allocation6], %s129
          %s131 = sshll.u32 [#allocation5], 4
          %s132 = int_to_ptr.vmem [resolvable:$true] %s131
          %137 = dma.hbm_to_vmem [thread:$0]  %s1, 8192, %s132, [#allocation6], 128, 128, 8
        $region16: #{tpu_custom_call.1} parent=11 // pred_fallthru
          _
        // Predicated region
        $region17: #{tpu_custom_call.1} parent=11 // pred_check
          %p138 = pneg %p84
        $region18: #{tpu_custom_call.1} parent=11 // pred_check_branch
          %140 = sbr.rel (%p138) target = $region20
        $region19: #{tpu_custom_call.1} parent=11 // pred_region
          %s142 = ssub.s32 128, 128
          %143 = vsyncadd [#allocation6], %s142
          %s145 = sshll.u32 [#allocation7], 4
          %s146 = int_to_ptr.vmem [resolvable:$true] %s145
          %148 = dma.hbm_to_vmem [thread:$0]  %s2, 128, %s146, [#allocation6]
        $region20: #{tpu_custom_call.1} parent=11 // pred_fallthru
          _
      $region12: #{tpu_custom_call.1} parent=5 // pred_fallthru
        _
      %p149 = scmp.lt.s32.totalorder %s16, 2
      // Predicated region
      $region21: #{tpu_custom_call.1} parent=5 // pred_check
        %p150 = pneg %p149
      $region22: #{tpu_custom_call.1} parent=5 // pred_check_branch
        %152 = sbr.rel (%p150) target = $region24
      $region23: #{tpu_custom_call.1} parent=5 // pred_region
        // Predicated region
        $region25: #{tpu_custom_call.1} parent=23 // pred_check
          %p153 = pneg %p36
        $region26: #{tpu_custom_call.1} parent=23 // pred_check_branch
          %155 = sbr.rel (%p153) target = $region28
        $region27: #{tpu_custom_call.1} parent=23 // pred_region
          %s156 = sand.u32 %s26, 1
          %s157 = scalar_lea.sflag [#allocation3], %s156
          %s158 = sand.u32 %s26, 1
          %s159 = smul.addr %s158, 256
          %s160 = scalar_lea.vmem [#allocation2], %s159
          %s161 = smul.u32 8, %s16
          %s163 = ssub.s32 4096, 4096
          %164 = vsyncadd %s157, %s163
          %s165 = smul.addr %s161, 4
          %s166 = smul.addr %s165, 128
          %s167 = scalar_lea.hbm %s0, %s166
          %s168 = sshll.u32 %s160, 4
          %s169 = int_to_ptr.vmem [resolvable:$true] %s168
          %174 = dma.hbm_to_vmem [thread:$0]  %s167, 4096, %s169, %s157, 512, 512, 32
        $region28: #{tpu_custom_call.1} parent=23 // pred_fallthru
          _
      $region24: #{tpu_custom_call.1} parent=5 // pred_fallthru
        _
      %p175 = scmp.le.s32.totalorder 1, %s16
      %p176 = scmp.lt.s32.totalorder %s16, 3
      %p177 = pnand %p175, %p176
      %p178 = pneg %p177
      // Predicated region
      $region29: #{tpu_custom_call.1} parent=5 // pred_check
        _
      $region30: #{tpu_custom_call.1} parent=5 // pred_check_branch
        %180 = sbr.rel (%p177) target = $region32
      $region31: #{tpu_custom_call.1} parent=5 // pred_region
        %s181 = ssub.s32 %s16, 1
        %s182 = sand.u32 %s29, 1
        %s183 = scalar_lea.sflag [#allocation3], %s182
        %s184 = sand.u32 %s29, 1
        %s185 = smul.addr %s184, 256
        %s186 = scalar_lea.vmem [#allocation2], %s185
        // Predicated region
        $region33: #{tpu_custom_call.1} parent=31 // pred_check
          %p187 = pneg %p42
        $region34: #{tpu_custom_call.1} parent=31 // pred_check_branch
          %189 = sbr.rel (%p187) target = $region36
        $region35: #{tpu_custom_call.1} parent=31 // pred_region
          %190 = dma.done %s183, 4096
        $region36: #{tpu_custom_call.1} parent=31 // pred_fallthru
          _
        // Predicated region
        $region37: #{tpu_custom_call.1} parent=31 // pred_check
          %p191 = pneg %p63
        $region38: #{tpu_custom_call.1} parent=31 // pred_check_branch
          %193 = sbr.rel (%p191) target = $region40
        $region39: #{tpu_custom_call.1} parent=31 // pred_region
          %194 = dma.done [#allocation6], 8192
        $region40: #{tpu_custom_call.1} parent=31 // pred_fallthru
          _
        // Predicated region
        $region41: #{tpu_custom_call.1} parent=31 // pred_check
          %p195 = pneg %p84
        $region42: #{tpu_custom_call.1} parent=31 // pred_check_branch
          %197 = sbr.rel (%p195) target = $region44
        $region43: #{tpu_custom_call.1} parent=31 // pred_region
          %198 = dma.done [#allocation6], 128
        $region44: #{tpu_custom_call.1} parent=31 // pred_fallthru
          _
        %s199 = sand.u32 %s29, 1
        %s200 = scalar_lea.sflag [#allocation3], %s199
        %s201 = sand.u32 %s29, 1
        %s202 = smul.addr %s201, 256
        %s203 = scalar_lea.vmem [#allocation2], %s202
        %p204 = pneg %p42
        %p205 = pneg %p39
        %p206 = pneg %p63
        %p207 = pneg %p60
        %p208 = pneg %p84
        %p209 = pneg %p81
        %p210 = pneg %p110
        %p211 = pneg %p107
        %s212 = sand.u32 %s97, 1
        %s213 = scalar_lea.sflag [#allocation4], %s212
        %s214 = sand.u32 %s97, 1
        %s215 = smul.addr %s214, 512
        %s216 = scalar_lea.vmem [#allocation8], %s215
        %s217 = smul.u32 8, %s21
        %s218 = smul.u32 32, %s21
        %v219 = vld [vmem:[%s186] sm:$0xff]
        %v220 = vld [vmem:[%s186 + $0x8] sm:$0xff]
        %v221 = vld [vmem:[%s186 + $0x10] sm:$0xff]
        %v222 = vld [vmem:[%s186 + $0x18] sm:$0xff]
        %v223 = vld [vmem:[%s186 + $0x20] sm:$0xff]
        %v224 = vld [vmem:[%s186 + $0x28] sm:$0xff]
        %v225 = vld [vmem:[%s186 + $0x30] sm:$0xff]
        %v226 = vld [vmem:[%s186 + $0x38] sm:$0xff]
        %v227 = vld [vmem:[%s186 + $0x40] sm:$0xff]
        %v228 = vld [vmem:[%s186 + $0x48] sm:$0xff]
        %v229 = vld [vmem:[%s186 + $0x50] sm:$0xff]
        %v230 = vld [vmem:[%s186 + $0x58] sm:$0xff]
        %v231 = vld [vmem:[%s186 + $0x60] sm:$0xff]
        %v232 = vld [vmem:[%s186 + $0x68] sm:$0xff]
        %v233 = vld [vmem:[%s186 + $0x70] sm:$0xff]
        %v234 = vld [vmem:[%s186 + $0x78] sm:$0xff]
        %v235 = vld [vmem:[%s186 + $0x80] sm:$0xff]
        %v236 = vld [vmem:[%s186 + $0x88] sm:$0xff]
        %v237 = vld [vmem:[%s186 + $0x90] sm:$0xff]
        %v238 = vld [vmem:[%s186 + $0x98] sm:$0xff]
        %v239 = vld [vmem:[%s186 + $0xa0] sm:$0xff]
        %v240 = vld [vmem:[%s186 + $0xa8] sm:$0xff]
        %v241 = vld [vmem:[%s186 + $0xb0] sm:$0xff]
        %v242 = vld [vmem:[%s186 + $0xb8] sm:$0xff]
        %v243 = vld [vmem:[%s186 + $0xc0] sm:$0xff]
        %v244 = vld [vmem:[%s186 + $0xc8] sm:$0xff]
        %v245 = vld [vmem:[%s186 + $0xd0] sm:$0xff]
        %v246 = vld [vmem:[%s186 + $0xd8] sm:$0xff]
        %v247 = vld [vmem:[%s186 + $0xe0] sm:$0xff]
        %v248 = vld [vmem:[%s186 + $0xe8] sm:$0xff]
        %v249 = vld [vmem:[%s186 + $0xf0] sm:$0xff]
        %v250 = vld [vmem:[%s186 + $0xf8] sm:$0xff]
        %v251 = vunpack.c.l.s8.bf16 %v219
        %v252 = vunpack.c.l.s8.bf16 %v220
        %v253 = vunpack.c.l.s8.bf16 %v221
        %v254 = vunpack.c.l.s8.bf16 %v222
        %v255 = vunpack.c.h.s8.bf16 %v219
        %v256 = vunpack.c.h.s8.bf16 %v220
        %v257 = vunpack.c.h.s8.bf16 %v221
        %v258 = vunpack.c.h.s8.bf16 %v222
        %v259 = vunpack.c.l.s8.bf16 %v223
        %v260 = vunpack.c.l.s8.bf16 %v224
        %v261 = vunpack.c.l.s8.bf16 %v225
        %v262 = vunpack.c.l.s8.bf16 %v226
        %v263 = vunpack.c.h.s8.bf16 %v223
        %v264 = vunpack.c.h.s8.bf16 %v224
        %v265 = vunpack.c.h.s8.bf16 %v225
        %v266 = vunpack.c.h.s8.bf16 %v226
        %v267 = vunpack.c.l.s8.bf16 %v227
        %v268 = vunpack.c.l.s8.bf16 %v228
        %v269 = vunpack.c.l.s8.bf16 %v229
        %v270 = vunpack.c.l.s8.bf16 %v230
        %v271 = vunpack.c.h.s8.bf16 %v227
        %v272 = vunpack.c.h.s8.bf16 %v228
        %v273 = vunpack.c.h.s8.bf16 %v229
        %v274 = vunpack.c.h.s8.bf16 %v230
        %v275 = vunpack.c.l.s8.bf16 %v231
        %v276 = vunpack.c.l.s8.bf16 %v232
        %v277 = vunpack.c.l.s8.bf16 %v233
        %v278 = vunpack.c.l.s8.bf16 %v234
        %v279 = vunpack.c.h.s8.bf16 %v231
        %v280 = vunpack.c.h.s8.bf16 %v232
        %v281 = vunpack.c.h.s8.bf16 %v233
        %v282 = vunpack.c.h.s8.bf16 %v234
        %v283 = vunpack.c.l.s8.bf16 %v235
        %v284 = vunpack.c.l.s8.bf16 %v236
        %v285 = vunpack.c.l.s8.bf16 %v237
        %v286 = vunpack.c.l.s8.bf16 %v238
        %v287 = vunpack.c.h.s8.bf16 %v235
        %v288 = vunpack.c.h.s8.bf16 %v236
        %v289 = vunpack.c.h.s8.bf16 %v237
        %v290 = vunpack.c.h.s8.bf16 %v238
        %v291 = vunpack.c.l.s8.bf16 %v239
        %v292 = vunpack.c.l.s8.bf16 %v240
        %v293 = vunpack.c.l.s8.bf16 %v241
        %v294 = vunpack.c.l.s8.bf16 %v242
        %v295 = vunpack.c.h.s8.bf16 %v239
        %v296 = vunpack.c.h.s8.bf16 %v240
        %v297 = vunpack.c.h.s8.bf16 %v241
        %v298 = vunpack.c.h.s8.bf16 %v242
        %v299 = vunpack.c.l.s8.bf16 %v243
        %v300 = vunpack.c.l.s8.bf16 %v244
        %v301 = vunpack.c.l.s8.bf16 %v245
        %v302 = vunpack.c.l.s8.bf16 %v246
        %v303 = vunpack.c.h.s8.bf16 %v243
        %v304 = vunpack.c.h.s8.bf16 %v244
        %v305 = vunpack.c.h.s8.bf16 %v245
        %v306 = vunpack.c.h.s8.bf16 %v246
        %v307 = vunpack.c.l.s8.bf16 %v247
        %v308 = vunpack.c.l.s8.bf16 %v248
        %v309 = vunpack.c.l.s8.bf16 %v249
        %v310 = vunpack.c.l.s8.bf16 %v250
        %v311 = vunpack.c.h.s8.bf16 %v247
        %v312 = vunpack.c.h.s8.bf16 %v248
        %v313 = vunpack.c.h.s8.bf16 %v249
        %v314 = vunpack.c.h.s8.bf16 %v250
        %v315 = vld [vmem:[#allocation5] sm:$0xff]
        %v316 = vld [vmem:[#allocation5 + $0x8] sm:$0xff]
        %v317 = vld [vmem:[#allocation5 + $0x10] sm:$0xff]
        %v318 = vld [vmem:[#allocation5 + $0x18] sm:$0xff]
        %v319 = vld [vmem:[#allocation5 + $0x20] sm:$0xff]
        %v320 = vld [vmem:[#allocation5 + $0x28] sm:$0xff]
        %v321 = vld [vmem:[#allocation5 + $0x30] sm:$0xff]
        %v322 = vld [vmem:[#allocation5 + $0x38] sm:$0xff]
        %v323 = vld [vmem:[#allocation5 + $0x40] sm:$0xff]
        %v324 = vld [vmem:[#allocation5 + $0x48] sm:$0xff]
        %v325 = vld [vmem:[#allocation5 + $0x50] sm:$0xff]
        %v326 = vld [vmem:[#allocation5 + $0x58] sm:$0xff]
        %v327 = vld [vmem:[#allocation5 + $0x60] sm:$0xff]
        %v328 = vld [vmem:[#allocation5 + $0x68] sm:$0xff]
        %v329 = vld [vmem:[#allocation5 + $0x70] sm:$0xff]
        %v330 = vld [vmem:[#allocation5 + $0x78] sm:$0xff]
        %v331 = vld [vmem:[#allocation5 + $0x80] sm:$0xff]
        %v332 = vld [vmem:[#allocation5 + $0x88] sm:$0xff]
        %v333 = vld [vmem:[#allocation5 + $0x90] sm:$0xff]
        %v334 = vld [vmem:[#allocation5 + $0x98] sm:$0xff]
        %v335 = vld [vmem:[#allocation5 + $0xa0] sm:$0xff]
        %v336 = vld [vmem:[#allocation5 + $0xa8] sm:$0xff]
        %v337 = vld [vmem:[#allocation5 + $0xb0] sm:$0xff]
        %v338 = vld [vmem:[#allocation5 + $0xb8] sm:$0xff]
        %v339 = vld [vmem:[#allocation5 + $0xc0] sm:$0xff]
        %v340 = vld [vmem:[#allocation5 + $0xc8] sm:$0xff]
        %v341 = vld [vmem:[#allocation5 + $0xd0] sm:$0xff]
        %v342 = vld [vmem:[#allocation5 + $0xd8] sm:$0xff]
        %v343 = vld [vmem:[#allocation5 + $0xe0] sm:$0xff]
        %v344 = vld [vmem:[#allocation5 + $0xe8] sm:$0xff]
        %v345 = vld [vmem:[#allocation5 + $0xf0] sm:$0xff]
        %v346 = vld [vmem:[#allocation5 + $0xf8] sm:$0xff]
        %v347 = vld [vmem:[#allocation5 + $0x100] sm:$0xff]
        %v348 = vld [vmem:[#allocation5 + $0x108] sm:$0xff]
        %v349 = vld [vmem:[#allocation5 + $0x110] sm:$0xff]
        %v350 = vld [vmem:[#allocation5 + $0x118] sm:$0xff]
        %v351 = vld [vmem:[#allocation5 + $0x120] sm:$0xff]
        %v352 = vld [vmem:[#allocation5 + $0x128] sm:$0xff]
        %v353 = vld [vmem:[#allocation5 + $0x130] sm:$0xff]
        %v354 = vld [vmem:[#allocation5 + $0x138] sm:$0xff]
        %v355 = vld [vmem:[#allocation5 + $0x140] sm:$0xff]
        %v356 = vld [vmem:[#allocation5 + $0x148] sm:$0xff]
        %v357 = vld [vmem:[#allocation5 + $0x150] sm:$0xff]
        %v358 = vld [vmem:[#allocation5 + $0x158] sm:$0xff]
        %v359 = vld [vmem:[#allocation5 + $0x160] sm:$0xff]
        %v360 = vld [vmem:[#allocation5 + $0x168] sm:$0xff]
        %v361 = vld [vmem:[#allocation5 + $0x170] sm:$0xff]
        %v362 = vld [vmem:[#allocation5 + $0x178] sm:$0xff]
        %v363 = vld [vmem:[#allocation5 + $0x180] sm:$0xff]
        %v364 = vld [vmem:[#allocation5 + $0x188] sm:$0xff]
        %v365 = vld [vmem:[#allocation5 + $0x190] sm:$0xff]
        %v366 = vld [vmem:[#allocation5 + $0x198] sm:$0xff]
        %v367 = vld [vmem:[#allocation5 + $0x1a0] sm:$0xff]
        %v368 = vld [vmem:[#allocation5 + $0x1a8] sm:$0xff]
        %v369 = vld [vmem:[#allocation5 + $0x1b0] sm:$0xff]
        %v370 = vld [vmem:[#allocation5 + $0x1b8] sm:$0xff]
        %v371 = vld [vmem:[#allocation5 + $0x1c0] sm:$0xff]
        %v372 = vld [vmem:[#allocation5 + $0x1c8] sm:$0xff]
        %v373 = vld [vmem:[#allocation5 + $0x1d0] sm:$0xff]
        %v374 = vld [vmem:[#allocation5 + $0x1d8] sm:$0xff]
        %v375 = vld [vmem:[#allocation5 + $0x1e0] sm:$0xff]
        %v376 = vld [vmem:[#allocation5 + $0x1e8] sm:$0xff]
        %v377 = vld [vmem:[#allocation5 + $0x1f0] sm:$0xff]
        %v378 = vld [vmem:[#allocation5 + $0x1f8] sm:$0xff]
        %v379 = vld [vmem:[#allocation7] sm:$0x77]
        %v381 = vlaneseq
        %v382 = vshrl.u32 %v381, 7
        %v383 = vsub.s32 0, %v382
        %v384 = vrot.slane %v379, %v383
        %v385 = vlaneseq
        %v386 = vshrl.u32 %v385, 7
        %v387 = vsub.s32 4, %v386
        %v388 = vrot.slane %v379, %v387
        %v391 = vlaneseq
        %v392 = vshrl.u32 %v391, 7
        %v393 = vsub.s32 0, %v392
        %v394 = vrot.slane %v384, %v393
        %v395 = vlaneseq
        %v396 = vshrl.u32 %v395, 7
        %v397 = vsub.s32 0, %v396
        %v398 = vrot.slane %v388, %v397
        %v463 = vunpack.c.l.b16 %v315
        %v464 = vunpack.c.h.b16 %v315
        %v465 = vunpack.c.l.b16 %v316
        %v466 = vunpack.c.h.b16 %v316
        %v467 = vunpack.c.l.b16 %v317
        %v468 = vunpack.c.h.b16 %v317
        %v469 = vunpack.c.l.b16 %v318
        %v470 = vunpack.c.h.b16 %v318
        %v471 = vunpack.c.l.b16 %v319
        %v472 = vunpack.c.h.b16 %v319
        %v473 = vunpack.c.l.b16 %v320
        %v474 = vunpack.c.h.b16 %v320
        %v475 = vunpack.c.l.b16 %v321
        %v476 = vunpack.c.h.b16 %v321
        %v477 = vunpack.c.l.b16 %v322
        %v478 = vunpack.c.h.b16 %v322
        %v479 = vunpack.c.l.b16 %v323
        %v480 = vunpack.c.h.b16 %v323
        %v481 = vunpack.c.l.b16 %v324
        %v482 = vunpack.c.h.b16 %v324
        %v483 = vunpack.c.l.b16 %v325
        %v484 = vunpack.c.h.b16 %v325
        %v485 = vunpack.c.l.b16 %v326
        %v486 = vunpack.c.h.b16 %v326
        %v487 = vunpack.c.l.b16 %v327
        %v488 = vunpack.c.h.b16 %v327
        %v489 = vunpack.c.l.b16 %v328
        %v490 = vunpack.c.h.b16 %v328
        %v491 = vunpack.c.l.b16 %v329
        %v492 = vunpack.c.h.b16 %v329
        %v493 = vunpack.c.l.b16 %v330
        %v494 = vunpack.c.h.b16 %v330
        %v495 = vunpack.c.l.b16 %v331
        %v496 = vunpack.c.h.b16 %v331
        %v497 = vunpack.c.l.b16 %v332
        %v498 = vunpack.c.h.b16 %v332
        %v499 = vunpack.c.l.b16 %v333
        %v500 = vunpack.c.h.b16 %v333
        %v501 = vunpack.c.l.b16 %v334
        %v502 = vunpack.c.h.b16 %v334
        %v503 = vunpack.c.l.b16 %v335
        %v504 = vunpack.c.h.b16 %v335
        %v505 = vunpack.c.l.b16 %v336
        %v506 = vunpack.c.h.b16 %v336
        %v507 = vunpack.c.l.b16 %v337
        %v508 = vunpack.c.h.b16 %v337
        %v509 = vunpack.c.l.b16 %v338
        %v510 = vunpack.c.h.b16 %v338
        %v511 = vunpack.c.l.b16 %v339
        %v512 = vunpack.c.h.b16 %v339
        %v513 = vunpack.c.l.b16 %v340
        %v514 = vunpack.c.h.b16 %v340
        %v515 = vunpack.c.l.b16 %v341
        %v516 = vunpack.c.h.b16 %v341
        %v517 = vunpack.c.l.b16 %v342
        %v518 = vunpack.c.h.b16 %v342
        %v519 = vunpack.c.l.b16 %v343
        %v520 = vunpack.c.h.b16 %v343
        %v521 = vunpack.c.l.b16 %v344
        %v522 = vunpack.c.h.b16 %v344
        %v523 = vunpack.c.l.b16 %v345
        %v524 = vunpack.c.h.b16 %v345
        %v525 = vunpack.c.l.b16 %v346
        %v526 = vunpack.c.h.b16 %v346
        %v527 = vunpack.c.l.b16 %v347
        %v528 = vunpack.c.h.b16 %v347
        %v529 = vunpack.c.l.b16 %v348
        %v530 = vunpack.c.h.b16 %v348
        %v531 = vunpack.c.l.b16 %v349
        %v532 = vunpack.c.h.b16 %v349
        %v533 = vunpack.c.l.b16 %v350
        %v534 = vunpack.c.h.b16 %v350
        %v535 = vunpack.c.l.b16 %v351
        %v536 = vunpack.c.h.b16 %v351
        %v537 = vunpack.c.l.b16 %v352
        %v538 = vunpack.c.h.b16 %v352
        %v539 = vunpack.c.l.b16 %v353
        %v540 = vunpack.c.h.b16 %v353
        %v541 = vunpack.c.l.b16 %v354
        %v542 = vunpack.c.h.b16 %v354
        %v543 = vunpack.c.l.b16 %v355
        %v544 = vunpack.c.h.b16 %v355
        %v545 = vunpack.c.l.b16 %v356
        %v546 = vunpack.c.h.b16 %v356
        %v547 = vunpack.c.l.b16 %v357
        %v548 = vunpack.c.h.b16 %v357
        %v549 = vunpack.c.l.b16 %v358
        %v550 = vunpack.c.h.b16 %v358
        %v551 = vunpack.c.l.b16 %v359
        %v552 = vunpack.c.h.b16 %v359
        %v553 = vunpack.c.l.b16 %v360
        %v554 = vunpack.c.h.b16 %v360
        %v555 = vunpack.c.l.b16 %v361
        %v556 = vunpack.c.h.b16 %v361
        %v557 = vunpack.c.l.b16 %v362
        %v558 = vunpack.c.h.b16 %v362
        %v559 = vunpack.c.l.b16 %v363
        %v560 = vunpack.c.h.b16 %v363
        %v561 = vunpack.c.l.b16 %v364
        %v562 = vunpack.c.h.b16 %v364
        %v563 = vunpack.c.l.b16 %v365
        %v564 = vunpack.c.h.b16 %v365
        %v565 = vunpack.c.l.b16 %v366
        %v566 = vunpack.c.h.b16 %v366
        %v567 = vunpack.c.l.b16 %v367
        %v568 = vunpack.c.h.b16 %v367
        %v569 = vunpack.c.l.b16 %v368
        %v570 = vunpack.c.h.b16 %v368
        %v571 = vunpack.c.l.b16 %v369
        %v572 = vunpack.c.h.b16 %v369
        %v573 = vunpack.c.l.b16 %v370
        %v574 = vunpack.c.h.b16 %v370
        %v575 = vunpack.c.l.b16 %v371
        %v576 = vunpack.c.h.b16 %v371
        %v577 = vunpack.c.l.b16 %v372
        %v578 = vunpack.c.h.b16 %v372
        %v579 = vunpack.c.l.b16 %v373
        %v580 = vunpack.c.h.b16 %v373
        %v581 = vunpack.c.l.b16 %v374
        %v582 = vunpack.c.h.b16 %v374
        %v583 = vunpack.c.l.b16 %v375
        %v584 = vunpack.c.h.b16 %v375
        %v585 = vunpack.c.l.b16 %v376
        %v586 = vunpack.c.h.b16 %v376
        %v587 = vunpack.c.l.b16 %v377
        %v588 = vunpack.c.h.b16 %v377
        %v589 = vunpack.c.l.b16 %v378
        %v590 = vunpack.c.h.b16 %v378
        %v591 = vpack.c.b16 %v465, %v463
        %v592 = vpack.c.b16 %v466, %v464
        %v593 = vpack.c.b16 %v469, %v467
        %v594 = vpack.c.b16 %v470, %v468
        %v595 = vpack.c.b16 %v473, %v471
        %v596 = vpack.c.b16 %v474, %v472
        %v597 = vpack.c.b16 %v477, %v475
        %v598 = vpack.c.b16 %v478, %v476
        %v599 = vpack.c.b16 %v481, %v479
        %v600 = vpack.c.b16 %v482, %v480
        %v601 = vpack.c.b16 %v485, %v483
        %v602 = vpack.c.b16 %v486, %v484
        %v603 = vpack.c.b16 %v489, %v487
        %v604 = vpack.c.b16 %v490, %v488
        %v605 = vpack.c.b16 %v493, %v491
        %v606 = vpack.c.b16 %v494, %v492
        %v607 = vpack.c.b16 %v497, %v495
        %v608 = vpack.c.b16 %v498, %v496
        %v609 = vpack.c.b16 %v501, %v499
        %v610 = vpack.c.b16 %v502, %v500
        %v611 = vpack.c.b16 %v505, %v503
        %v612 = vpack.c.b16 %v506, %v504
        %v613 = vpack.c.b16 %v509, %v507
        %v614 = vpack.c.b16 %v510, %v508
        %v615 = vpack.c.b16 %v513, %v511
        %v616 = vpack.c.b16 %v514, %v512
        %v617 = vpack.c.b16 %v517, %v515
        %v618 = vpack.c.b16 %v518, %v516
        %v619 = vpack.c.b16 %v521, %v519
        %v620 = vpack.c.b16 %v522, %v520
        %v621 = vpack.c.b16 %v525, %v523
        %v622 = vpack.c.b16 %v526, %v524
        %v623 = vpack.c.b16 %v529, %v527
        %v624 = vpack.c.b16 %v530, %v528
        %v625 = vpack.c.b16 %v533, %v531
        %v626 = vpack.c.b16 %v534, %v532
        %v627 = vpack.c.b16 %v537, %v535
        %v628 = vpack.c.b16 %v538, %v536
        %v629 = vpack.c.b16 %v541, %v539
        %v630 = vpack.c.b16 %v542, %v540
        %v631 = vpack.c.b16 %v545, %v543
        %v632 = vpack.c.b16 %v546, %v544
        %v633 = vpack.c.b16 %v549, %v547
        %v634 = vpack.c.b16 %v550, %v548
        %v635 = vpack.c.b16 %v553, %v551
        %v636 = vpack.c.b16 %v554, %v552
        %v637 = vpack.c.b16 %v557, %v555
        %v638 = vpack.c.b16 %v558, %v556
        %v639 = vpack.c.b16 %v561, %v559
        %v640 = vpack.c.b16 %v562, %v560
        %v641 = vpack.c.b16 %v565, %v563
        %v642 = vpack.c.b16 %v566, %v564
        %v643 = vpack.c.b16 %v569, %v567
        %v644 = vpack.c.b16 %v570, %v568
        %v645 = vpack.c.b16 %v573, %v571
        %v646 = vpack.c.b16 %v574, %v572
        %v647 = vpack.c.b16 %v577, %v575
        %v648 = vpack.c.b16 %v578, %v576
        %v649 = vpack.c.b16 %v581, %v579
        %v650 = vpack.c.b16 %v582, %v580
        %v651 = vpack.c.b16 %v585, %v583
        %v652 = vpack.c.b16 %v586, %v584
        %v653 = vpack.c.b16 %v589, %v587
        %v654 = vpack.c.b16 %v590, %v588
        %719 = vmatprep.subr.bf16.mxu0 %v606
        %720 = vmatpush1.bf16.msra.mxu0 %v605
        %721 = vmatprep.subr.bf16.mxu0 %v604
        %722 = vmatpush1.bf16.msra.mxu0 %v603
        %723 = vmatprep.subr.bf16.mxu0 %v602
        %724 = vmatpush1.bf16.msra.mxu0 %v601
        %725 = vmatprep.subr.bf16.mxu0 %v600
        %726 = vmatpush1.bf16.msra.mxu0 %v599
        %727 = vmatprep.subr.bf16.mxu0 %v598
        %728 = vmatpush1.bf16.msra.mxu0 %v597
        %729 = vmatprep.subr.bf16.mxu0 %v596
        %730 = vmatpush1.bf16.msra.mxu0 %v595
        %731 = vmatprep.subr.bf16.mxu0 %v594
        %732 = vmatpush1.bf16.msra.mxu0 %v593
        %733 = vmatprep.subr.bf16.mxu0 %v592
        %734 = vmatpush1.bf16.msra.mxu0 %v591
        %735 = vmatprep.subr.bf16.mxu0 %v622
        %736 = vmatpush2.bf16.msra.mxu0 %v621
        %737 = vmatprep.subr.bf16.mxu0 %v620
        %738 = vmatpush2.bf16.msra.mxu0 %v619
        %739 = vmatprep.subr.bf16.mxu0 %v618
        %740 = vmatpush2.bf16.msra.mxu0 %v617
        %741 = vmatprep.subr.bf16.mxu0 %v616
        %742 = vmatpush2.bf16.msra.mxu0 %v615
        %743 = vmatprep.subr.bf16.mxu0 %v614
        %744 = vmatpush2.bf16.msra.mxu0 %v613
        %745 = vmatprep.subr.bf16.mxu0 %v612
        %746 = vmatpush2.bf16.msra.mxu0 %v611
        %747 = vmatprep.subr.bf16.mxu0 %v610
        %748 = vmatpush2.bf16.msra.mxu0 %v609
        %749 = vmatprep.subr.bf16.mxu0 %v608
        %750 = vmatpush2.bf16.msra.mxu0 %v607
        %751 = vmatprep.mubr.bf16.mxu0 %v252
        %752 = vmatmul.mubr.bf16.gmra.mxu0 %v251
        %v753 = vpop.f32.mrf.mxu0
        %v754 = vadd.f32 %v394, %v753
        %v755 = vpop.f32.mrf.mxu0
        %v756 = vadd.f32 %v398, %v755
        %v757 = vpop.f32.mrf.mxu0
        %v758 = vadd.f32 %v394, %v757
        %v759 = vpop.f32.mrf.mxu0
        %v760 = vadd.f32 %v398, %v759
        %761 = vmatprep.mubr.bf16.mxu0 %v256
        %762 = vmatmul.mubr.bf16.gmra.mxu0 %v255
        %v763 = vpop.f32.mrf.mxu0
        %v764 = vadd.f32 %v394, %v763
        %v765 = vpop.f32.mrf.mxu0
        %v766 = vadd.f32 %v398, %v765
        %v767 = vpop.f32.mrf.mxu0
        %v768 = vadd.f32 %v394, %v767
        %v769 = vpop.f32.mrf.mxu0
        %v770 = vadd.f32 %v398, %v769
        %771 = vmatprep.mubr.bf16.mxu0 %v260
        %772 = vmatmul.mubr.bf16.gmra.mxu0 %v259
        %v773 = vpop.f32.mrf.mxu0
        %v774 = vadd.f32 %v394, %v773
        %v775 = vpop.f32.mrf.mxu0
        %v776 = vadd.f32 %v398, %v775
        %v777 = vpop.f32.mrf.mxu0
        %v778 = vadd.f32 %v394, %v777
        %v779 = vpop.f32.mrf.mxu0
        %v780 = vadd.f32 %v398, %v779
        %781 = vmatprep.mubr.bf16.mxu0 %v264
        %782 = vmatmul.mubr.bf16.gmra.mxu0 %v263
        %v783 = vpop.f32.mrf.mxu0
        %v784 = vadd.f32 %v394, %v783
        %v785 = vpop.f32.mrf.mxu0
        %v786 = vadd.f32 %v398, %v785
        %v787 = vpop.f32.mrf.mxu0
        %v788 = vadd.f32 %v394, %v787
        %v789 = vpop.f32.mrf.mxu0
        %v790 = vadd.f32 %v398, %v789
        %791 = vmatprep.mubr.bf16.mxu0 %v268
        %792 = vmatmul.mubr.bf16.gmra.mxu0 %v267
        %v793 = vpop.f32.mrf.mxu0
        %v794 = vadd.f32 %v394, %v793
        %v795 = vpop.f32.mrf.mxu0
        %v796 = vadd.f32 %v398, %v795
        %v797 = vpop.f32.mrf.mxu0
        %v798 = vadd.f32 %v394, %v797
        %v799 = vpop.f32.mrf.mxu0
        %v800 = vadd.f32 %v398, %v799
        %801 = vmatprep.mubr.bf16.mxu0 %v272
        %802 = vmatmul.mubr.bf16.gmra.mxu0 %v271
        %v803 = vpop.f32.mrf.mxu0
        %v804 = vadd.f32 %v394, %v803
        %v805 = vpop.f32.mrf.mxu0
        %v806 = vadd.f32 %v398, %v805
        %v807 = vpop.f32.mrf.mxu0
        %v808 = vadd.f32 %v394, %v807
        %v809 = vpop.f32.mrf.mxu0
        %v810 = vadd.f32 %v398, %v809
        %811 = vmatprep.mubr.bf16.mxu0 %v276
        %812 = vmatmul.mubr.bf16.gmra.mxu0 %v275
        %v813 = vpop.f32.mrf.mxu0
        %v814 = vadd.f32 %v394, %v813
        %v815 = vpop.f32.mrf.mxu0
        %v816 = vadd.f32 %v398, %v815
        %v817 = vpop.f32.mrf.mxu0
        %v818 = vadd.f32 %v394, %v817
        %v819 = vpop.f32.mrf.mxu0
        %v820 = vadd.f32 %v398, %v819
        %821 = vmatprep.mubr.bf16.mxu0 %v280
        %822 = vmatmul.mubr.bf16.gmra.mxu0 %v279
        %v823 = vpop.f32.mrf.mxu0
        %v824 = vadd.f32 %v394, %v823
        %v825 = vpop.f32.mrf.mxu0
        %v826 = vadd.f32 %v398, %v825
        %v827 = vpop.f32.mrf.mxu0
        %v828 = vadd.f32 %v394, %v827
        %v829 = vpop.f32.mrf.mxu0
        %v830 = vadd.f32 %v398, %v829
        %831 = vmatprep.mubr.bf16.mxu0 %v284
        %832 = vmatmul.mubr.bf16.gmra.mxu0 %v283
        %v833 = vpop.f32.mrf.mxu0
        %v834 = vadd.f32 %v394, %v833
        %v835 = vpop.f32.mrf.mxu0
        %v836 = vadd.f32 %v398, %v835
        %v837 = vpop.f32.mrf.mxu0
        %v838 = vadd.f32 %v394, %v837
        %v839 = vpop.f32.mrf.mxu0
        %v840 = vadd.f32 %v398, %v839
        %841 = vmatprep.mubr.bf16.mxu0 %v288
        %842 = vmatmul.mubr.bf16.gmra.mxu0 %v287
        %v843 = vpop.f32.mrf.mxu0
        %v844 = vadd.f32 %v394, %v843
        %v845 = vpop.f32.mrf.mxu0
        %v846 = vadd.f32 %v398, %v845
        %v847 = vpop.f32.mrf.mxu0
        %v848 = vadd.f32 %v394, %v847
        %v849 = vpop.f32.mrf.mxu0
        %v850 = vadd.f32 %v398, %v849
        %851 = vmatprep.mubr.bf16.mxu0 %v292
        %852 = vmatmul.mubr.bf16.gmra.mxu0 %v291
        %v853 = vpop.f32.mrf.mxu0
        %v854 = vadd.f32 %v394, %v853
        %v855 = vpop.f32.mrf.mxu0
        %v856 = vadd.f32 %v398, %v855
        %v857 = vpop.f32.mrf.mxu0
        %v858 = vadd.f32 %v394, %v857
        %v859 = vpop.f32.mrf.mxu0
        %v860 = vadd.f32 %v398, %v859
        %861 = vmatprep.mubr.bf16.mxu0 %v296
        %862 = vmatmul.mubr.bf16.gmra.mxu0 %v295
        %v863 = vpop.f32.mrf.mxu0
        %v864 = vadd.f32 %v394, %v863
        %v865 = vpop.f32.mrf.mxu0
        %v866 = vadd.f32 %v398, %v865
        %v867 = vpop.f32.mrf.mxu0
        %v868 = vadd.f32 %v394, %v867
        %v869 = vpop.f32.mrf.mxu0
        %v870 = vadd.f32 %v398, %v869
        %871 = vmatprep.mubr.bf16.mxu0 %v300
        %872 = vmatmul.mubr.bf16.gmra.mxu0 %v299
        %v873 = vpop.f32.mrf.mxu0
        %v874 = vadd.f32 %v394, %v873
        %v875 = vpop.f32.mrf.mxu0
        %v876 = vadd.f32 %v398, %v875
        %v877 = vpop.f32.mrf.mxu0
        %v878 = vadd.f32 %v394, %v877
        %v879 = vpop.f32.mrf.mxu0
        %v880 = vadd.f32 %v398, %v879
        %881 = vmatprep.mubr.bf16.mxu0 %v304
        %882 = vmatmul.mubr.bf16.gmra.mxu0 %v303
        %v883 = vpop.f32.mrf.mxu0
        %v884 = vadd.f32 %v394, %v883
        %v885 = vpop.f32.mrf.mxu0
        %v886 = vadd.f32 %v398, %v885
        %v887 = vpop.f32.mrf.mxu0
        %v888 = vadd.f32 %v394, %v887
        %v889 = vpop.f32.mrf.mxu0
        %v890 = vadd.f32 %v398, %v889
        %891 = vmatprep.mubr.bf16.mxu0 %v308
        %892 = vmatmul.mubr.bf16.gmra.mxu0 %v307
        %v893 = vpop.f32.mrf.mxu0
        %v894 = vadd.f32 %v394, %v893
        %v895 = vpop.f32.mrf.mxu0
        %v896 = vadd.f32 %v398, %v895
        %v897 = vpop.f32.mrf.mxu0
        %v898 = vadd.f32 %v394, %v897
        %v899 = vpop.f32.mrf.mxu0
        %v900 = vadd.f32 %v398, %v899
        %901 = vmatprep.mubr.bf16.mxu0 %v312
        %902 = vmatmul.mubr.bf16.gmra.mxu0 %v311
        %v903 = vpop.f32.mrf.mxu0
        %v904 = vadd.f32 %v394, %v903
        %v905 = vpop.f32.mrf.mxu0
        %v906 = vadd.f32 %v398, %v905
        %v907 = vpop.f32.mrf.mxu0
        %v908 = vadd.f32 %v394, %v907
        %v909 = vpop.f32.mrf.mxu0
        %v910 = vadd.f32 %v398, %v909
        %911 = vdwg.mxu0
        %912 = vmatprep.subr.bf16.mxu0 %v638
        %913 = vmatpush1.bf16.msra.mxu0 %v637
        %914 = vmatprep.subr.bf16.mxu0 %v636
        %915 = vmatpush1.bf16.msra.mxu0 %v635
        %916 = vmatprep.subr.bf16.mxu0 %v634
        %917 = vmatpush1.bf16.msra.mxu0 %v633
        %918 = vmatprep.subr.bf16.mxu0 %v632
        %919 = vmatpush1.bf16.msra.mxu0 %v631
        %920 = vmatprep.subr.bf16.mxu0 %v630
        %921 = vmatpush1.bf16.msra.mxu0 %v629
        %922 = vmatprep.subr.bf16.mxu0 %v628
        %923 = vmatpush1.bf16.msra.mxu0 %v627
        %924 = vmatprep.subr.bf16.mxu0 %v626
        %925 = vmatpush1.bf16.msra.mxu0 %v625
        %926 = vmatprep.subr.bf16.mxu0 %v624
        %927 = vmatpush1.bf16.msra.mxu0 %v623
        %928 = vmatprep.subr.bf16.mxu0 %v654
        %929 = vmatpush2.bf16.msra.mxu0 %v653
        %930 = vmatprep.subr.bf16.mxu0 %v652
        %931 = vmatpush2.bf16.msra.mxu0 %v651
        %932 = vmatprep.subr.bf16.mxu0 %v650
        %933 = vmatpush2.bf16.msra.mxu0 %v649
        %934 = vmatprep.subr.bf16.mxu0 %v648
        %935 = vmatpush2.bf16.msra.mxu0 %v647
        %936 = vmatprep.subr.bf16.mxu0 %v646
        %937 = vmatpush2.bf16.msra.mxu0 %v645
        %938 = vmatprep.subr.bf16.mxu0 %v644
        %939 = vmatpush2.bf16.msra.mxu0 %v643
        %940 = vmatprep.subr.bf16.mxu0 %v642
        %941 = vmatpush2.bf16.msra.mxu0 %v641
        %942 = vmatprep.subr.bf16.mxu0 %v640
        %943 = vmatpush2.bf16.msra.mxu0 %v639
        %944 = vmatprep.mubr.bf16.mxu0 %v254
        %945 = vmatmul.mubr.bf16.gmra.mxu0 %v253
        %v946 = vpop.f32.mrf.mxu0
        %v947 = vadd.f32 %v754, %v946
        %v948 = vpop.f32.mrf.mxu0
        %v949 = vadd.f32 %v756, %v948
        %v950 = vpop.f32.mrf.mxu0
        %v951 = vadd.f32 %v758, %v950
        %v952 = vpop.f32.mrf.mxu0
        %v953 = vadd.f32 %v760, %v952
        %954 = vmatprep.mubr.bf16.mxu0 %v258
        %955 = vmatmul.mubr.bf16.gmra.mxu0 %v257
        %v956 = vpop.f32.mrf.mxu0
        %v957 = vadd.f32 %v764, %v956
        %v958 = vpop.f32.mrf.mxu0
        %v959 = vadd.f32 %v766, %v958
        %v960 = vpop.f32.mrf.mxu0
        %v961 = vadd.f32 %v768, %v960
        %v962 = vpop.f32.mrf.mxu0
        %v963 = vadd.f32 %v770, %v962
        %964 = vmatprep.mubr.bf16.mxu0 %v262
        %965 = vmatmul.mubr.bf16.gmra.mxu0 %v261
        %v966 = vpop.f32.mrf.mxu0
        %v967 = vadd.f32 %v774, %v966
        %v968 = vpop.f32.mrf.mxu0
        %v969 = vadd.f32 %v776, %v968
        %v970 = vpop.f32.mrf.mxu0
        %v971 = vadd.f32 %v778, %v970
        %v972 = vpop.f32.mrf.mxu0
        %v973 = vadd.f32 %v780, %v972
        %974 = vmatprep.mubr.bf16.mxu0 %v266
        %975 = vmatmul.mubr.bf16.gmra.mxu0 %v265
        %v976 = vpop.f32.mrf.mxu0
        %v977 = vadd.f32 %v784, %v976
        %v978 = vpop.f32.mrf.mxu0
        %v979 = vadd.f32 %v786, %v978
        %v980 = vpop.f32.mrf.mxu0
        %v981 = vadd.f32 %v788, %v980
        %v982 = vpop.f32.mrf.mxu0
        %v983 = vadd.f32 %v790, %v982
        %984 = vmatprep.mubr.bf16.mxu0 %v270
        %985 = vmatmul.mubr.bf16.gmra.mxu0 %v269
        %v986 = vpop.f32.mrf.mxu0
        %v987 = vadd.f32 %v794, %v986
        %v988 = vpop.f32.mrf.mxu0
        %v989 = vadd.f32 %v796, %v988
        %v990 = vpop.f32.mrf.mxu0
        %v991 = vadd.f32 %v798, %v990
        %v992 = vpop.f32.mrf.mxu0
        %v993 = vadd.f32 %v800, %v992
        %994 = vmatprep.mubr.bf16.mxu0 %v274
        %995 = vmatmul.mubr.bf16.gmra.mxu0 %v273
        %v996 = vpop.f32.mrf.mxu0
        %v997 = vadd.f32 %v804, %v996
        %v998 = vpop.f32.mrf.mxu0
        %v999 = vadd.f32 %v806, %v998
        %v1000 = vpop.f32.mrf.mxu0
        %v1001 = vadd.f32 %v808, %v1000
        %v1002 = vpop.f32.mrf.mxu0
        %v1003 = vadd.f32 %v810, %v1002
        %1004 = vmatprep.mubr.bf16.mxu0 %v278
        %1005 = vmatmul.mubr.bf16.gmra.mxu0 %v277
        %v1006 = vpop.f32.mrf.mxu0
        %v1007 = vadd.f32 %v814, %v1006
        %v1008 = vpop.f32.mrf.mxu0
        %v1009 = vadd.f32 %v816, %v1008
        %v1010 = vpop.f32.mrf.mxu0
        %v1011 = vadd.f32 %v818, %v1010
        %v1012 = vpop.f32.mrf.mxu0
        %v1013 = vadd.f32 %v820, %v1012
        %1014 = vmatprep.mubr.bf16.mxu0 %v282
        %1015 = vmatmul.mubr.bf16.gmra.mxu0 %v281
        %v1016 = vpop.f32.mrf.mxu0
        %v1017 = vadd.f32 %v824, %v1016
        %v1018 = vpop.f32.mrf.mxu0
        %v1019 = vadd.f32 %v826, %v1018
        %v1020 = vpop.f32.mrf.mxu0
        %v1021 = vadd.f32 %v828, %v1020
        %v1022 = vpop.f32.mrf.mxu0
        %v1023 = vadd.f32 %v830, %v1022
        %1024 = vmatprep.mubr.bf16.mxu0 %v286
        %1025 = vmatmul.mubr.bf16.gmra.mxu0 %v285
        %v1026 = vpop.f32.mrf.mxu0
        %v1027 = vadd.f32 %v834, %v1026
        %v1028 = vpop.f32.mrf.mxu0
        %v1029 = vadd.f32 %v836, %v1028
        %v1030 = vpop.f32.mrf.mxu0
        %v1031 = vadd.f32 %v838, %v1030
        %v1032 = vpop.f32.mrf.mxu0
        %v1033 = vadd.f32 %v840, %v1032
        %1034 = vmatprep.mubr.bf16.mxu0 %v290
        %1035 = vmatmul.mubr.bf16.gmra.mxu0 %v289
        %v1036 = vpop.f32.mrf.mxu0
        %v1037 = vadd.f32 %v844, %v1036
        %v1038 = vpop.f32.mrf.mxu0
        %v1039 = vadd.f32 %v846, %v1038
        %v1040 = vpop.f32.mrf.mxu0
        %v1041 = vadd.f32 %v848, %v1040
        %v1042 = vpop.f32.mrf.mxu0
        %v1043 = vadd.f32 %v850, %v1042
        %1044 = vmatprep.mubr.bf16.mxu0 %v294
        %1045 = vmatmul.mubr.bf16.gmra.mxu0 %v293
        %v1046 = vpop.f32.mrf.mxu0
        %v1047 = vadd.f32 %v854, %v1046
        %v1048 = vpop.f32.mrf.mxu0
        %v1049 = vadd.f32 %v856, %v1048
        %v1050 = vpop.f32.mrf.mxu0
        %v1051 = vadd.f32 %v858, %v1050
        %v1052 = vpop.f32.mrf.mxu0
        %v1053 = vadd.f32 %v860, %v1052
        %1054 = vmatprep.mubr.bf16.mxu0 %v298
        %1055 = vmatmul.mubr.bf16.gmra.mxu0 %v297
        %v1056 = vpop.f32.mrf.mxu0
        %v1057 = vadd.f32 %v864, %v1056
        %v1058 = vpop.f32.mrf.mxu0
        %v1059 = vadd.f32 %v866, %v1058
        %v1060 = vpop.f32.mrf.mxu0
        %v1061 = vadd.f32 %v868, %v1060
        %v1062 = vpop.f32.mrf.mxu0
        %v1063 = vadd.f32 %v870, %v1062
        %1064 = vmatprep.mubr.bf16.mxu0 %v302
        %1065 = vmatmul.mubr.bf16.gmra.mxu0 %v301
        %v1066 = vpop.f32.mrf.mxu0
        %v1067 = vadd.f32 %v874, %v1066
        %v1068 = vpop.f32.mrf.mxu0
        %v1069 = vadd.f32 %v876, %v1068
        %v1070 = vpop.f32.mrf.mxu0
        %v1071 = vadd.f32 %v878, %v1070
        %v1072 = vpop.f32.mrf.mxu0
        %v1073 = vadd.f32 %v880, %v1072
        %1074 = vmatprep.mubr.bf16.mxu0 %v306
        %1075 = vmatmul.mubr.bf16.gmra.mxu0 %v305
        %v1076 = vpop.f32.mrf.mxu0
        %v1077 = vadd.f32 %v884, %v1076
        %v1078 = vpop.f32.mrf.mxu0
        %v1079 = vadd.f32 %v886, %v1078
        %v1080 = vpop.f32.mrf.mxu0
        %v1081 = vadd.f32 %v888, %v1080
        %v1082 = vpop.f32.mrf.mxu0
        %v1083 = vadd.f32 %v890, %v1082
        %1084 = vmatprep.mubr.bf16.mxu0 %v310
        %1085 = vmatmul.mubr.bf16.gmra.mxu0 %v309
        %v1086 = vpop.f32.mrf.mxu0
        %v1087 = vadd.f32 %v894, %v1086
        %v1088 = vpop.f32.mrf.mxu0
        %v1089 = vadd.f32 %v896, %v1088
        %v1090 = vpop.f32.mrf.mxu0
        %v1091 = vadd.f32 %v898, %v1090
        %v1092 = vpop.f32.mrf.mxu0
        %v1093 = vadd.f32 %v900, %v1092
        %1094 = vmatprep.mubr.bf16.mxu0 %v314
        %1095 = vmatmul.mubr.bf16.gmra.mxu0 %v313
        %v1096 = vpop.f32.mrf.mxu0
        %v1097 = vadd.f32 %v904, %v1096
        %v1098 = vpop.f32.mrf.mxu0
        %v1099 = vadd.f32 %v906, %v1098
        %v1100 = vpop.f32.mrf.mxu0
        %v1101 = vadd.f32 %v908, %v1100
        %v1102 = vpop.f32.mrf.mxu0
        %v1103 = vadd.f32 %v910, %v1102
        %1104 = vdwg.mxu0
        %v1105 = vadd.f32 %v947, %v949
        %1106 = vadd.xlane.f32.xlu0 %v1105
        %v1107 = vpop.xlane.xlu0 %1106
        %v1108 = vadd.f32 %v951, %v953
        %1109 = vadd.xlane.f32.xlu0 %v1108
        %v1110 = vpop.xlane.xlu0 %1109
        %v1111 = vadd.f32 %v957, %v959
        %1112 = vadd.xlane.f32.xlu0 %v1111
        %v1113 = vpop.xlane.xlu0 %1112
        %v1114 = vadd.f32 %v961, %v963
        %1115 = vadd.xlane.f32.xlu0 %v1114
        %v1116 = vpop.xlane.xlu0 %1115
        %v1117 = vadd.f32 %v967, %v969
        %1118 = vadd.xlane.f32.xlu0 %v1117
        %v1119 = vpop.xlane.xlu0 %1118
        %v1120 = vadd.f32 %v971, %v973
        %1121 = vadd.xlane.f32.xlu0 %v1120
        %v1122 = vpop.xlane.xlu0 %1121
        %v1123 = vadd.f32 %v977, %v979
        %1124 = vadd.xlane.f32.xlu0 %v1123
        %v1125 = vpop.xlane.xlu0 %1124
        %v1126 = vadd.f32 %v981, %v983
        %1127 = vadd.xlane.f32.xlu0 %v1126
        %v1128 = vpop.xlane.xlu0 %1127
        %v1129 = vadd.f32 %v987, %v989
        %1130 = vadd.xlane.f32.xlu0 %v1129
        %v1131 = vpop.xlane.xlu0 %1130
        %v1132 = vadd.f32 %v991, %v993
        %1133 = vadd.xlane.f32.xlu0 %v1132
        %v1134 = vpop.xlane.xlu0 %1133
        %v1135 = vadd.f32 %v997, %v999
        %1136 = vadd.xlane.f32.xlu0 %v1135
        %v1137 = vpop.xlane.xlu0 %1136
        %v1138 = vadd.f32 %v1001, %v1003
        %1139 = vadd.xlane.f32.xlu0 %v1138
        %v1140 = vpop.xlane.xlu0 %1139
        %v1141 = vadd.f32 %v1007, %v1009
        %1142 = vadd.xlane.f32.xlu0 %v1141
        %v1143 = vpop.xlane.xlu0 %1142
        %v1144 = vadd.f32 %v1011, %v1013
        %1145 = vadd.xlane.f32.xlu0 %v1144
        %v1146 = vpop.xlane.xlu0 %1145
        %v1147 = vadd.f32 %v1017, %v1019
        %1148 = vadd.xlane.f32.xlu0 %v1147
        %v1149 = vpop.xlane.xlu0 %1148
        %v1150 = vadd.f32 %v1021, %v1023
        %1151 = vadd.xlane.f32.xlu0 %v1150
        %v1152 = vpop.xlane.xlu0 %1151
        %v1153 = vadd.f32 %v1027, %v1029
        %1154 = vadd.xlane.f32.xlu0 %v1153
        %v1155 = vpop.xlane.xlu0 %1154
        %v1156 = vadd.f32 %v1031, %v1033
        %1157 = vadd.xlane.f32.xlu0 %v1156
        %v1158 = vpop.xlane.xlu0 %1157
        %v1159 = vadd.f32 %v1037, %v1039
        %1160 = vadd.xlane.f32.xlu0 %v1159
        %v1161 = vpop.xlane.xlu0 %1160
        %v1162 = vadd.f32 %v1041, %v1043
        %1163 = vadd.xlane.f32.xlu0 %v1162
        %v1164 = vpop.xlane.xlu0 %1163
        %v1165 = vadd.f32 %v1047, %v1049
        %1166 = vadd.xlane.f32.xlu0 %v1165
        %v1167 = vpop.xlane.xlu0 %1166
        %v1168 = vadd.f32 %v1051, %v1053
        %1169 = vadd.xlane.f32.xlu0 %v1168
        %v1170 = vpop.xlane.xlu0 %1169
        %v1171 = vadd.f32 %v1057, %v1059
        %1172 = vadd.xlane.f32.xlu0 %v1171
        %v1173 = vpop.xlane.xlu0 %1172
        %v1174 = vadd.f32 %v1061, %v1063
        %1175 = vadd.xlane.f32.xlu0 %v1174
        %v1176 = vpop.xlane.xlu0 %1175
        %v1177 = vadd.f32 %v1067, %v1069
        %1178 = vadd.xlane.f32.xlu0 %v1177
        %v1179 = vpop.xlane.xlu0 %1178
        %v1180 = vadd.f32 %v1071, %v1073
        %1181 = vadd.xlane.f32.xlu0 %v1180
        %v1182 = vpop.xlane.xlu0 %1181
        %v1183 = vadd.f32 %v1077, %v1079
        %1184 = vadd.xlane.f32.xlu0 %v1183
        %v1185 = vpop.xlane.xlu0 %1184
        %v1186 = vadd.f32 %v1081, %v1083
        %1187 = vadd.xlane.f32.xlu0 %v1186
        %v1188 = vpop.xlane.xlu0 %1187
        %v1189 = vadd.f32 %v1087, %v1089
        %1190 = vadd.xlane.f32.xlu0 %v1189
        %v1191 = vpop.xlane.xlu0 %1190
        %v1192 = vadd.f32 %v1091, %v1093
        %1193 = vadd.xlane.f32.xlu0 %v1192
        %v1194 = vpop.xlane.xlu0 %1193
        %v1195 = vadd.f32 %v1097, %v1099
        %1196 = vadd.xlane.f32.xlu0 %v1195
        %v1197 = vpop.xlane.xlu0 %1196
        %v1198 = vadd.f32 %v1101, %v1103
        %1199 = vadd.xlane.f32.xlu0 %v1198
        %v1200 = vpop.xlane.xlu0 %1199
        %v1201 = vrcp.pop 256.0
        %v1202 = vmul.f32 %v1107, %v1201
        %v1203 = vmul.f32 %v1110, %v1201
        %v1204 = vmul.f32 %v1113, %v1201
        %v1205 = vmul.f32 %v1116, %v1201
        %v1206 = vmul.f32 %v1119, %v1201
        %v1207 = vmul.f32 %v1122, %v1201
        %v1208 = vmul.f32 %v1125, %v1201
        %v1209 = vmul.f32 %v1128, %v1201
        %v1210 = vmul.f32 %v1131, %v1201
        %v1211 = vmul.f32 %v1134, %v1201
        %v1212 = vmul.f32 %v1137, %v1201
        %v1213 = vmul.f32 %v1140, %v1201
        %v1214 = vmul.f32 %v1143, %v1201
        %v1215 = vmul.f32 %v1146, %v1201
        %v1216 = vmul.f32 %v1149, %v1201
        %v1217 = vmul.f32 %v1152, %v1201
        %v1218 = vmul.f32 %v1155, %v1201
        %v1219 = vmul.f32 %v1158, %v1201
        %v1220 = vmul.f32 %v1161, %v1201
        %v1221 = vmul.f32 %v1164, %v1201
        %v1222 = vmul.f32 %v1167, %v1201
        %v1223 = vmul.f32 %v1170, %v1201
        %v1224 = vmul.f32 %v1173, %v1201
        %v1225 = vmul.f32 %v1176, %v1201
        %v1226 = vmul.f32 %v1179, %v1201
        %v1227 = vmul.f32 %v1182, %v1201
        %v1228 = vmul.f32 %v1185, %v1201
        %v1229 = vmul.f32 %v1188, %v1201
        %v1230 = vmul.f32 %v1191, %v1201
        %v1231 = vmul.f32 %v1194, %v1201
        %v1232 = vmul.f32 %v1197, %v1201
        %v1233 = vmul.f32 %v1200, %v1201
        %v1234 = vsub.f32 %v947, %v1202
        %v1235 = vsub.f32 %v949, %v1202
        %v1236 = vsub.f32 %v951, %v1203
        %v1237 = vsub.f32 %v953, %v1203
        %v1238 = vsub.f32 %v957, %v1204
        %v1239 = vsub.f32 %v959, %v1204
        %v1240 = vsub.f32 %v961, %v1205
        %v1241 = vsub.f32 %v963, %v1205
        %v1242 = vsub.f32 %v967, %v1206
        %v1243 = vsub.f32 %v969, %v1206
        %v1244 = vsub.f32 %v971, %v1207
        %v1245 = vsub.f32 %v973, %v1207
        %v1246 = vsub.f32 %v977, %v1208
        %v1247 = vsub.f32 %v979, %v1208
        %v1248 = vsub.f32 %v981, %v1209
        %v1249 = vsub.f32 %v983, %v1209
        %v1250 = vsub.f32 %v987, %v1210
        %v1251 = vsub.f32 %v989, %v1210
        %v1252 = vsub.f32 %v991, %v1211
        %v1253 = vsub.f32 %v993, %v1211
        %v1254 = vsub.f32 %v997, %v1212
        %v1255 = vsub.f32 %v999, %v1212
        %v1256 = vsub.f32 %v1001, %v1213
        %v1257 = vsub.f32 %v1003, %v1213
        %v1258 = vsub.f32 %v1007, %v1214
        %v1259 = vsub.f32 %v1009, %v1214
        %v1260 = vsub.f32 %v1011, %v1215
        %v1261 = vsub.f32 %v1013, %v1215
        %v1262 = vsub.f32 %v1017, %v1216
        %v1263 = vsub.f32 %v1019, %v1216
        %v1264 = vsub.f32 %v1021, %v1217
        %v1265 = vsub.f32 %v1023, %v1217
        %v1266 = vsub.f32 %v1027, %v1218
        %v1267 = vsub.f32 %v1029, %v1218
        %v1268 = vsub.f32 %v1031, %v1219
        %v1269 = vsub.f32 %v1033, %v1219
        %v1270 = vsub.f32 %v1037, %v1220
        %v1271 = vsub.f32 %v1039, %v1220
        %v1272 = vsub.f32 %v1041, %v1221
        %v1273 = vsub.f32 %v1043, %v1221
        %v1274 = vsub.f32 %v1047, %v1222
        %v1275 = vsub.f32 %v1049, %v1222
        %v1276 = vsub.f32 %v1051, %v1223
        %v1277 = vsub.f32 %v1053, %v1223
        %v1278 = vsub.f32 %v1057, %v1224
        %v1279 = vsub.f32 %v1059, %v1224
        %v1280 = vsub.f32 %v1061, %v1225
        %v1281 = vsub.f32 %v1063, %v1225
        %v1282 = vsub.f32 %v1067, %v1226
        %v1283 = vsub.f32 %v1069, %v1226
        %v1284 = vsub.f32 %v1071, %v1227
        %v1285 = vsub.f32 %v1073, %v1227
        %v1286 = vsub.f32 %v1077, %v1228
        %v1287 = vsub.f32 %v1079, %v1228
        %v1288 = vsub.f32 %v1081, %v1229
        %v1289 = vsub.f32 %v1083, %v1229
        %v1290 = vsub.f32 %v1087, %v1230
        %v1291 = vsub.f32 %v1089, %v1230
        %v1292 = vsub.f32 %v1091, %v1231
        %v1293 = vsub.f32 %v1093, %v1231
        %v1294 = vsub.f32 %v1097, %v1232
        %v1295 = vsub.f32 %v1099, %v1232
        %v1296 = vsub.f32 %v1101, %v1233
        %v1297 = vsub.f32 %v1103, %v1233
        %v1298 = vmul.f32 %v1234, %v1234
        %v1299 = vmul.f32 %v1235, %v1235
        %v1300 = vmul.f32 %v1236, %v1236
        %v1301 = vmul.f32 %v1237, %v1237
        %v1302 = vmul.f32 %v1238, %v1238
        %v1303 = vmul.f32 %v1239, %v1239
        %v1304 = vmul.f32 %v1240, %v1240
        %v1305 = vmul.f32 %v1241, %v1241
        %v1306 = vmul.f32 %v1242, %v1242
        %v1307 = vmul.f32 %v1243, %v1243
        %v1308 = vmul.f32 %v1244, %v1244
        %v1309 = vmul.f32 %v1245, %v1245
        %v1310 = vmul.f32 %v1246, %v1246
        %v1311 = vmul.f32 %v1247, %v1247
        %v1312 = vmul.f32 %v1248, %v1248
        %v1313 = vmul.f32 %v1249, %v1249
        %v1314 = vmul.f32 %v1250, %v1250
        %v1315 = vmul.f32 %v1251, %v1251
        %v1316 = vmul.f32 %v1252, %v1252
        %v1317 = vmul.f32 %v1253, %v1253
        %v1318 = vmul.f32 %v1254, %v1254
        %v1319 = vmul.f32 %v1255, %v1255
        %v1320 = vmul.f32 %v1256, %v1256
        %v1321 = vmul.f32 %v1257, %v1257
        %v1322 = vmul.f32 %v1258, %v1258
        %v1323 = vmul.f32 %v1259, %v1259
        %v1324 = vmul.f32 %v1260, %v1260
        %v1325 = vmul.f32 %v1261, %v1261
        %v1326 = vmul.f32 %v1262, %v1262
        %v1327 = vmul.f32 %v1263, %v1263
        %v1328 = vmul.f32 %v1264, %v1264
        %v1329 = vmul.f32 %v1265, %v1265
        %v1330 = vmul.f32 %v1266, %v1266
        %v1331 = vmul.f32 %v1267, %v1267
        %v1332 = vmul.f32 %v1268, %v1268
        %v1333 = vmul.f32 %v1269, %v1269
        %v1334 = vmul.f32 %v1270, %v1270
        %v1335 = vmul.f32 %v1271, %v1271
        %v1336 = vmul.f32 %v1272, %v1272
        %v1337 = vmul.f32 %v1273, %v1273
        %v1338 = vmul.f32 %v1274, %v1274
        %v1339 = vmul.f32 %v1275, %v1275
        %v1340 = vmul.f32 %v1276, %v1276
        %v1341 = vmul.f32 %v1277, %v1277
        %v1342 = vmul.f32 %v1278, %v1278
        %v1343 = vmul.f32 %v1279, %v1279
        %v1344 = vmul.f32 %v1280, %v1280
        %v1345 = vmul.f32 %v1281, %v1281
        %v1346 = vmul.f32 %v1282, %v1282
        %v1347 = vmul.f32 %v1283, %v1283
        %v1348 = vmul.f32 %v1284, %v1284
        %v1349 = vmul.f32 %v1285, %v1285
        %v1350 = vmul.f32 %v1286, %v1286
        %v1351 = vmul.f32 %v1287, %v1287
        %v1352 = vmul.f32 %v1288, %v1288
        %v1353 = vmul.f32 %v1289, %v1289
        %v1354 = vmul.f32 %v1290, %v1290
        %v1355 = vmul.f32 %v1291, %v1291
        %v1356 = vmul.f32 %v1292, %v1292
        %v1357 = vmul.f32 %v1293, %v1293
        %v1358 = vmul.f32 %v1294, %v1294
        %v1359 = vmul.f32 %v1295, %v1295
        %v1360 = vmul.f32 %v1296, %v1296
        %v1361 = vmul.f32 %v1297, %v1297
        %v1362 = vadd.f32 %v1298, %v1299
        %1363 = vadd.xlane.f32.xlu0 %v1362
        %v1364 = vpop.xlane.xlu0 %1363
        %v1365 = vadd.f32 %v1300, %v1301
        %1366 = vadd.xlane.f32.xlu0 %v1365
        %v1367 = vpop.xlane.xlu0 %1366
        %v1368 = vadd.f32 %v1302, %v1303
        %1369 = vadd.xlane.f32.xlu0 %v1368
        %v1370 = vpop.xlane.xlu0 %1369
        %v1371 = vadd.f32 %v1304, %v1305
        %1372 = vadd.xlane.f32.xlu0 %v1371
        %v1373 = vpop.xlane.xlu0 %1372
        %v1374 = vadd.f32 %v1306, %v1307
        %1375 = vadd.xlane.f32.xlu0 %v1374
        %v1376 = vpop.xlane.xlu0 %1375
        %v1377 = vadd.f32 %v1308, %v1309
        %1378 = vadd.xlane.f32.xlu0 %v1377
        %v1379 = vpop.xlane.xlu0 %1378
        %v1380 = vadd.f32 %v1310, %v1311
        %1381 = vadd.xlane.f32.xlu0 %v1380
        %v1382 = vpop.xlane.xlu0 %1381
        %v1383 = vadd.f32 %v1312, %v1313
        %1384 = vadd.xlane.f32.xlu0 %v1383
        %v1385 = vpop.xlane.xlu0 %1384
        %v1386 = vadd.f32 %v1314, %v1315
        %1387 = vadd.xlane.f32.xlu0 %v1386
        %v1388 = vpop.xlane.xlu0 %1387
        %v1389 = vadd.f32 %v1316, %v1317
        %1390 = vadd.xlane.f32.xlu0 %v1389
        %v1391 = vpop.xlane.xlu0 %1390
        %v1392 = vadd.f32 %v1318, %v1319
        %1393 = vadd.xlane.f32.xlu0 %v1392
        %v1394 = vpop.xlane.xlu0 %1393
        %v1395 = vadd.f32 %v1320, %v1321
        %1396 = vadd.xlane.f32.xlu0 %v1395
        %v1397 = vpop.xlane.xlu0 %1396
        %v1398 = vadd.f32 %v1322, %v1323
        %1399 = vadd.xlane.f32.xlu0 %v1398
        %v1400 = vpop.xlane.xlu0 %1399
        %v1401 = vadd.f32 %v1324, %v1325
        %1402 = vadd.xlane.f32.xlu0 %v1401
        %v1403 = vpop.xlane.xlu0 %1402
        %v1404 = vadd.f32 %v1326, %v1327
        %1405 = vadd.xlane.f32.xlu0 %v1404
        %v1406 = vpop.xlane.xlu0 %1405
        %v1407 = vadd.f32 %v1328, %v1329
        %1408 = vadd.xlane.f32.xlu0 %v1407
        %v1409 = vpop.xlane.xlu0 %1408
        %v1410 = vadd.f32 %v1330, %v1331
        %1411 = vadd.xlane.f32.xlu0 %v1410
        %v1412 = vpop.xlane.xlu0 %1411
        %v1413 = vadd.f32 %v1332, %v1333
        %1414 = vadd.xlane.f32.xlu0 %v1413
        %v1415 = vpop.xlane.xlu0 %1414
        %v1416 = vadd.f32 %v1334, %v1335
        %1417 = vadd.xlane.f32.xlu0 %v1416
        %v1418 = vpop.xlane.xlu0 %1417
        %v1419 = vadd.f32 %v1336, %v1337
        %1420 = vadd.xlane.f32.xlu0 %v1419
        %v1421 = vpop.xlane.xlu0 %1420
        %v1422 = vadd.f32 %v1338, %v1339
        %1423 = vadd.xlane.f32.xlu0 %v1422
        %v1424 = vpop.xlane.xlu0 %1423
        %v1425 = vadd.f32 %v1340, %v1341
        %1426 = vadd.xlane.f32.xlu0 %v1425
        %v1427 = vpop.xlane.xlu0 %1426
        %v1428 = vadd.f32 %v1342, %v1343
        %1429 = vadd.xlane.f32.xlu0 %v1428
        %v1430 = vpop.xlane.xlu0 %1429
        %v1431 = vadd.f32 %v1344, %v1345
        %1432 = vadd.xlane.f32.xlu0 %v1431
        %v1433 = vpop.xlane.xlu0 %1432
        %v1434 = vadd.f32 %v1346, %v1347
        %1435 = vadd.xlane.f32.xlu0 %v1434
        %v1436 = vpop.xlane.xlu0 %1435
        %v1437 = vadd.f32 %v1348, %v1349
        %1438 = vadd.xlane.f32.xlu0 %v1437
        %v1439 = vpop.xlane.xlu0 %1438
        %v1440 = vadd.f32 %v1350, %v1351
        %1441 = vadd.xlane.f32.xlu0 %v1440
        %v1442 = vpop.xlane.xlu0 %1441
        %v1443 = vadd.f32 %v1352, %v1353
        %1444 = vadd.xlane.f32.xlu0 %v1443
        %v1445 = vpop.xlane.xlu0 %1444
        %v1446 = vadd.f32 %v1354, %v1355
        %1447 = vadd.xlane.f32.xlu0 %v1446
        %v1448 = vpop.xlane.xlu0 %1447
        %v1449 = vadd.f32 %v1356, %v1357
        %1450 = vadd.xlane.f32.xlu0 %v1449
        %v1451 = vpop.xlane.xlu0 %1450
        %v1452 = vadd.f32 %v1358, %v1359
        %1453 = vadd.xlane.f32.xlu0 %v1452
        %v1454 = vpop.xlane.xlu0 %1453
        %v1455 = vadd.f32 %v1360, %v1361
        %1456 = vadd.xlane.f32.xlu0 %v1455
        %v1457 = vpop.xlane.xlu0 %1456
        %v1458 = vmul.f32 %v1364, %v1201
        %v1459 = vmul.f32 %v1367, %v1201
        %v1460 = vmul.f32 %v1370, %v1201
        %v1461 = vmul.f32 %v1373, %v1201
        %v1462 = vmul.f32 %v1376, %v1201
        %v1463 = vmul.f32 %v1379, %v1201
        %v1464 = vmul.f32 %v1382, %v1201
        %v1465 = vmul.f32 %v1385, %v1201
        %v1466 = vmul.f32 %v1388, %v1201
        %v1467 = vmul.f32 %v1391, %v1201
        %v1468 = vmul.f32 %v1394, %v1201
        %v1469 = vmul.f32 %v1397, %v1201
        %v1470 = vmul.f32 %v1400, %v1201
        %v1471 = vmul.f32 %v1403, %v1201
        %v1472 = vmul.f32 %v1406, %v1201
        %v1473 = vmul.f32 %v1409, %v1201
        %v1474 = vmul.f32 %v1412, %v1201
        %v1475 = vmul.f32 %v1415, %v1201
        %v1476 = vmul.f32 %v1418, %v1201
        %v1477 = vmul.f32 %v1421, %v1201
        %v1478 = vmul.f32 %v1424, %v1201
        %v1479 = vmul.f32 %v1427, %v1201
        %v1480 = vmul.f32 %v1430, %v1201
        %v1481 = vmul.f32 %v1433, %v1201
        %v1482 = vmul.f32 %v1436, %v1201
        %v1483 = vmul.f32 %v1439, %v1201
        %v1484 = vmul.f32 %v1442, %v1201
        %v1485 = vmul.f32 %v1445, %v1201
        %v1486 = vmul.f32 %v1448, %v1201
        %v1487 = vmul.f32 %v1451, %v1201
        %v1488 = vmul.f32 %v1454, %v1201
        %v1489 = vmul.f32 %v1457, %v1201
        %v1490 = vadd.f32 %v1458, 1e-05
        %v1491 = vadd.f32 %v1459, 1e-05
        %v1492 = vadd.f32 %v1460, 1e-05
        %v1493 = vadd.f32 %v1461, 1e-05
        %v1494 = vadd.f32 %v1462, 1e-05
        %v1495 = vadd.f32 %v1463, 1e-05
        %v1496 = vadd.f32 %v1464, 1e-05
        %v1497 = vadd.f32 %v1465, 1e-05
        %v1498 = vadd.f32 %v1466, 1e-05
        %v1499 = vadd.f32 %v1467, 1e-05
        %v1500 = vadd.f32 %v1468, 1e-05
        %v1501 = vadd.f32 %v1469, 1e-05
        %v1502 = vadd.f32 %v1470, 1e-05
        %v1503 = vadd.f32 %v1471, 1e-05
        %v1504 = vadd.f32 %v1472, 1e-05
        %v1505 = vadd.f32 %v1473, 1e-05
        %v1506 = vadd.f32 %v1474, 1e-05
        %v1507 = vadd.f32 %v1475, 1e-05
        %v1508 = vadd.f32 %v1476, 1e-05
        %v1509 = vadd.f32 %v1477, 1e-05
        %v1510 = vadd.f32 %v1478, 1e-05
        %v1511 = vadd.f32 %v1479, 1e-05
        %v1512 = vadd.f32 %v1480, 1e-05
        %v1513 = vadd.f32 %v1481, 1e-05
        %v1514 = vadd.f32 %v1482, 1e-05
        %v1515 = vadd.f32 %v1483, 1e-05
        %v1516 = vadd.f32 %v1484, 1e-05
        %v1517 = vadd.f32 %v1485, 1e-05
        %v1518 = vadd.f32 %v1486, 1e-05
        %v1519 = vadd.f32 %v1487, 1e-05
        %v1520 = vadd.f32 %v1488, 1e-05
        %v1521 = vadd.f32 %v1489, 1e-05
        %v1522 = vrsqrt.pop %v1490
        %v1523 = vrsqrt.pop %v1491
        %v1524 = vrsqrt.pop %v1492
        %v1525 = vrsqrt.pop %v1493
        %v1526 = vrsqrt.pop %v1494
        %v1527 = vrsqrt.pop %v1495
        %v1528 = vrsqrt.pop %v1496
        %v1529 = vrsqrt.pop %v1497
        %v1530 = vrsqrt.pop %v1498
        %v1531 = vrsqrt.pop %v1499
        %v1532 = vrsqrt.pop %v1500
        %v1533 = vrsqrt.pop %v1501
        %v1534 = vrsqrt.pop %v1502
        %v1535 = vrsqrt.pop %v1503
        %v1536 = vrsqrt.pop %v1504
        %v1537 = vrsqrt.pop %v1505
        %v1538 = vrsqrt.pop %v1506
        %v1539 = vrsqrt.pop %v1507
        %v1540 = vrsqrt.pop %v1508
        %v1541 = vrsqrt.pop %v1509
        %v1542 = vrsqrt.pop %v1510
        %v1543 = vrsqrt.pop %v1511
        %v1544 = vrsqrt.pop %v1512
        %v1545 = vrsqrt.pop %v1513
        %v1546 = vrsqrt.pop %v1514
        %v1547 = vrsqrt.pop %v1515
        %v1548 = vrsqrt.pop %v1516
        %v1549 = vrsqrt.pop %v1517
        %v1550 = vrsqrt.pop %v1518
        %v1551 = vrsqrt.pop %v1519
        %v1552 = vrsqrt.pop %v1520
        %v1553 = vrsqrt.pop %v1521
        %v1554 = vmul.f32 %v1234, %v1522
        %v1555 = vmul.f32 %v1235, %v1522
        %v1556 = vmul.f32 %v1236, %v1523
        %v1557 = vmul.f32 %v1237, %v1523
        %v1558 = vmul.f32 %v1238, %v1524
        %v1559 = vmul.f32 %v1239, %v1524
        %v1560 = vmul.f32 %v1240, %v1525
        %v1561 = vmul.f32 %v1241, %v1525
        %v1562 = vmul.f32 %v1242, %v1526
        %v1563 = vmul.f32 %v1243, %v1526
        %v1564 = vmul.f32 %v1244, %v1527
        %v1565 = vmul.f32 %v1245, %v1527
        %v1566 = vmul.f32 %v1246, %v1528
        %v1567 = vmul.f32 %v1247, %v1528
        %v1568 = vmul.f32 %v1248, %v1529
        %v1569 = vmul.f32 %v1249, %v1529
        %v1570 = vmul.f32 %v1250, %v1530
        %v1571 = vmul.f32 %v1251, %v1530
        %v1572 = vmul.f32 %v1252, %v1531
        %v1573 = vmul.f32 %v1253, %v1531
        %v1574 = vmul.f32 %v1254, %v1532
        %v1575 = vmul.f32 %v1255, %v1532
        %v1576 = vmul.f32 %v1256, %v1533
        %v1577 = vmul.f32 %v1257, %v1533
        %v1578 = vmul.f32 %v1258, %v1534
        %v1579 = vmul.f32 %v1259, %v1534
        %v1580 = vmul.f32 %v1260, %v1535
        %v1581 = vmul.f32 %v1261, %v1535
        %v1582 = vmul.f32 %v1262, %v1536
        %v1583 = vmul.f32 %v1263, %v1536
        %v1584 = vmul.f32 %v1264, %v1537
        %v1585 = vmul.f32 %v1265, %v1537
        %v1586 = vmul.f32 %v1266, %v1538
        %v1587 = vmul.f32 %v1267, %v1538
        %v1588 = vmul.f32 %v1268, %v1539
        %v1589 = vmul.f32 %v1269, %v1539
        %v1590 = vmul.f32 %v1270, %v1540
        %v1591 = vmul.f32 %v1271, %v1540
        %v1592 = vmul.f32 %v1272, %v1541
        %v1593 = vmul.f32 %v1273, %v1541
        %v1594 = vmul.f32 %v1274, %v1542
        %v1595 = vmul.f32 %v1275, %v1542
        %v1596 = vmul.f32 %v1276, %v1543
        %v1597 = vmul.f32 %v1277, %v1543
        %v1598 = vmul.f32 %v1278, %v1544
        %v1599 = vmul.f32 %v1279, %v1544
        %v1600 = vmul.f32 %v1280, %v1545
        %v1601 = vmul.f32 %v1281, %v1545
        %v1602 = vmul.f32 %v1282, %v1546
        %v1603 = vmul.f32 %v1283, %v1546
        %v1604 = vmul.f32 %v1284, %v1547
        %v1605 = vmul.f32 %v1285, %v1547
        %v1606 = vmul.f32 %v1286, %v1548
        %v1607 = vmul.f32 %v1287, %v1548
        %v1608 = vmul.f32 %v1288, %v1549
        %v1609 = vmul.f32 %v1289, %v1549
        %v1610 = vmul.f32 %v1290, %v1550
        %v1611 = vmul.f32 %v1291, %v1550
        %v1612 = vmul.f32 %v1292, %v1551
        %v1613 = vmul.f32 %v1293, %v1551
        %v1614 = vmul.f32 %v1294, %v1552
        %v1615 = vmul.f32 %v1295, %v1552
        %v1616 = vmul.f32 %v1296, %v1553
        %v1617 = vmul.f32 %v1297, %v1553
        %v1618 = vlaneseq
        %v1619 = vshrl.u32 %v1618, 7
        %v1620 = vsub.s32 1, %v1619
        %v1621 = vrot.slane %v379, %v1620
        %v1622 = vlaneseq
        %v1623 = vshrl.u32 %v1622, 7
        %v1624 = vsub.s32 5, %v1623
        %v1625 = vrot.slane %v379, %v1624
        %v1628 = vlaneseq
        %v1629 = vshrl.u32 %v1628, 7
        %v1630 = vsub.s32 1, %v1629
        %v1631 = vrot.slane %v1621, %v1630
        %v1632 = vlaneseq
        %v1633 = vshrl.u32 %v1632, 7
        %v1634 = vsub.s32 1, %v1633
        %v1635 = vrot.slane %v1625, %v1634
        %v1636 = vmul.f32 %v1554, %v1631
        %v1637 = vmul.f32 %v1555, %v1635
        %v1638 = vmul.f32 %v1556, %v1631
        %v1639 = vmul.f32 %v1557, %v1635
        %v1640 = vmul.f32 %v1558, %v1631
        %v1641 = vmul.f32 %v1559, %v1635
        %v1642 = vmul.f32 %v1560, %v1631
        %v1643 = vmul.f32 %v1561, %v1635
        %v1644 = vmul.f32 %v1562, %v1631
        %v1645 = vmul.f32 %v1563, %v1635
        %v1646 = vmul.f32 %v1564, %v1631
        %v1647 = vmul.f32 %v1565, %v1635
        %v1648 = vmul.f32 %v1566, %v1631
        %v1649 = vmul.f32 %v1567, %v1635
        %v1650 = vmul.f32 %v1568, %v1631
        %v1651 = vmul.f32 %v1569, %v1635
        %v1652 = vmul.f32 %v1570, %v1631
        %v1653 = vmul.f32 %v1571, %v1635
        %v1654 = vmul.f32 %v1572, %v1631
        %v1655 = vmul.f32 %v1573, %v1635
        %v1656 = vmul.f32 %v1574, %v1631
        %v1657 = vmul.f32 %v1575, %v1635
        %v1658 = vmul.f32 %v1576, %v1631
        %v1659 = vmul.f32 %v1577, %v1635
        %v1660 = vmul.f32 %v1578, %v1631
        %v1661 = vmul.f32 %v1579, %v1635
        %v1662 = vmul.f32 %v1580, %v1631
        %v1663 = vmul.f32 %v1581, %v1635
        %v1664 = vmul.f32 %v1582, %v1631
        %v1665 = vmul.f32 %v1583, %v1635
        %v1666 = vmul.f32 %v1584, %v1631
        %v1667 = vmul.f32 %v1585, %v1635
        %v1668 = vmul.f32 %v1586, %v1631
        %v1669 = vmul.f32 %v1587, %v1635
        %v1670 = vmul.f32 %v1588, %v1631
        %v1671 = vmul.f32 %v1589, %v1635
        %v1672 = vmul.f32 %v1590, %v1631
        %v1673 = vmul.f32 %v1591, %v1635
        %v1674 = vmul.f32 %v1592, %v1631
        %v1675 = vmul.f32 %v1593, %v1635
        %v1676 = vmul.f32 %v1594, %v1631
        %v1677 = vmul.f32 %v1595, %v1635
        %v1678 = vmul.f32 %v1596, %v1631
        %v1679 = vmul.f32 %v1597, %v1635
        %v1680 = vmul.f32 %v1598, %v1631
        %v1681 = vmul.f32 %v1599, %v1635
        %v1682 = vmul.f32 %v1600, %v1631
        %v1683 = vmul.f32 %v1601, %v1635
        %v1684 = vmul.f32 %v1602, %v1631
        %v1685 = vmul.f32 %v1603, %v1635
        %v1686 = vmul.f32 %v1604, %v1631
        %v1687 = vmul.f32 %v1605, %v1635
        %v1688 = vmul.f32 %v1606, %v1631
        %v1689 = vmul.f32 %v1607, %v1635
        %v1690 = vmul.f32 %v1608, %v1631
        %v1691 = vmul.f32 %v1609, %v1635
        %v1692 = vmul.f32 %v1610, %v1631
        %v1693 = vmul.f32 %v1611, %v1635
        %v1694 = vmul.f32 %v1612, %v1631
        %v1695 = vmul.f32 %v1613, %v1635
        %v1696 = vmul.f32 %v1614, %v1631
        %v1697 = vmul.f32 %v1615, %v1635
        %v1698 = vmul.f32 %v1616, %v1631
        %v1699 = vmul.f32 %v1617, %v1635
        %v1700 = vlaneseq
        %v1701 = vshrl.u32 %v1700, 7
        %v1702 = vsub.s32 2, %v1701
        %v1703 = vrot.slane %v379, %v1702
        %v1704 = vlaneseq
        %v1705 = vshrl.u32 %v1704, 7
        %v1706 = vsub.s32 6, %v1705
        %v1707 = vrot.slane %v379, %v1706
        %v1710 = vlaneseq
        %v1711 = vshrl.u32 %v1710, 7
        %v1712 = vsub.s32 2, %v1711
        %v1713 = vrot.slane %v1703, %v1712
        %v1714 = vlaneseq
        %v1715 = vshrl.u32 %v1714, 7
        %v1716 = vsub.s32 2, %v1715
        %v1717 = vrot.slane %v1707, %v1716
        %v1718 = vadd.f32 %v1636, %v1713
        %v1719 = vadd.f32 %v1637, %v1717
        %v1720 = vadd.f32 %v1638, %v1713
        %v1721 = vadd.f32 %v1639, %v1717
        %v1722 = vadd.f32 %v1640, %v1713
        %v1723 = vadd.f32 %v1641, %v1717
        %v1724 = vadd.f32 %v1642, %v1713
        %v1725 = vadd.f32 %v1643, %v1717
        %v1726 = vadd.f32 %v1644, %v1713
        %v1727 = vadd.f32 %v1645, %v1717
        %v1728 = vadd.f32 %v1646, %v1713
        %v1729 = vadd.f32 %v1647, %v1717
        %v1730 = vadd.f32 %v1648, %v1713
        %v1731 = vadd.f32 %v1649, %v1717
        %v1732 = vadd.f32 %v1650, %v1713
        %v1733 = vadd.f32 %v1651, %v1717
        %v1734 = vadd.f32 %v1652, %v1713
        %v1735 = vadd.f32 %v1653, %v1717
        %v1736 = vadd.f32 %v1654, %v1713
        %v1737 = vadd.f32 %v1655, %v1717
        %v1738 = vadd.f32 %v1656, %v1713
        %v1739 = vadd.f32 %v1657, %v1717
        %v1740 = vadd.f32 %v1658, %v1713
        %v1741 = vadd.f32 %v1659, %v1717
        %v1742 = vadd.f32 %v1660, %v1713
        %v1743 = vadd.f32 %v1661, %v1717
        %v1744 = vadd.f32 %v1662, %v1713
        %v1745 = vadd.f32 %v1663, %v1717
        %v1746 = vadd.f32 %v1664, %v1713
        %v1747 = vadd.f32 %v1665, %v1717
        %v1748 = vadd.f32 %v1666, %v1713
        %v1749 = vadd.f32 %v1667, %v1717
        %v1750 = vadd.f32 %v1668, %v1713
        %v1751 = vadd.f32 %v1669, %v1717
        %v1752 = vadd.f32 %v1670, %v1713
        %v1753 = vadd.f32 %v1671, %v1717
        %v1754 = vadd.f32 %v1672, %v1713
        %v1755 = vadd.f32 %v1673, %v1717
        %v1756 = vadd.f32 %v1674, %v1713
        %v1757 = vadd.f32 %v1675, %v1717
        %v1758 = vadd.f32 %v1676, %v1713
        %v1759 = vadd.f32 %v1677, %v1717
        %v1760 = vadd.f32 %v1678, %v1713
        %v1761 = vadd.f32 %v1679, %v1717
        %v1762 = vadd.f32 %v1680, %v1713
        %v1763 = vadd.f32 %v1681, %v1717
        %v1764 = vadd.f32 %v1682, %v1713
        %v1765 = vadd.f32 %v1683, %v1717
        %v1766 = vadd.f32 %v1684, %v1713
        %v1767 = vadd.f32 %v1685, %v1717
        %v1768 = vadd.f32 %v1686, %v1713
        %v1769 = vadd.f32 %v1687, %v1717
        %v1770 = vadd.f32 %v1688, %v1713
        %v1771 = vadd.f32 %v1689, %v1717
        %v1772 = vadd.f32 %v1690, %v1713
        %v1773 = vadd.f32 %v1691, %v1717
        %v1774 = vadd.f32 %v1692, %v1713
        %v1775 = vadd.f32 %v1693, %v1717
        %v1776 = vadd.f32 %v1694, %v1713
        %v1777 = vadd.f32 %v1695, %v1717
        %v1778 = vadd.f32 %v1696, %v1713
        %v1779 = vadd.f32 %v1697, %v1717
        %v1780 = vadd.f32 %v1698, %v1713
        %v1781 = vadd.f32 %v1699, %v1717
        %1782 = vst [vmem:[%s216] sm:$0xff] %v1718
        %1783 = vst [vmem:[%s216 + $0x8] sm:$0xff] %v1719
        %1784 = vst [vmem:[%s216 + $0x10] sm:$0xff] %v1720
        %1785 = vst [vmem:[%s216 + $0x18] sm:$0xff] %v1721
        %1786 = vst [vmem:[%s216 + $0x20] sm:$0xff] %v1722
        %1787 = vst [vmem:[%s216 + $0x28] sm:$0xff] %v1723
        %1788 = vst [vmem:[%s216 + $0x30] sm:$0xff] %v1724
        %1789 = vst [vmem:[%s216 + $0x38] sm:$0xff] %v1725
        %1790 = vst [vmem:[%s216 + $0x40] sm:$0xff] %v1726
        %1791 = vst [vmem:[%s216 + $0x48] sm:$0xff] %v1727
        %1792 = vst [vmem:[%s216 + $0x50] sm:$0xff] %v1728
        %1793 = vst [vmem:[%s216 + $0x58] sm:$0xff] %v1729
        %1794 = vst [vmem:[%s216 + $0x60] sm:$0xff] %v1730
        %1795 = vst [vmem:[%s216 + $0x68] sm:$0xff] %v1731
        %1796 = vst [vmem:[%s216 + $0x70] sm:$0xff] %v1732
        %1797 = vst [vmem:[%s216 + $0x78] sm:$0xff] %v1733
        %1798 = vst [vmem:[%s216 + $0x80] sm:$0xff] %v1734
        %1799 = vst [vmem:[%s216 + $0x88] sm:$0xff] %v1735
        %1800 = vst [vmem:[%s216 + $0x90] sm:$0xff] %v1736
        %1801 = vst [vmem:[%s216 + $0x98] sm:$0xff] %v1737
        %1802 = vst [vmem:[%s216 + $0xa0] sm:$0xff] %v1738
        %1803 = vst [vmem:[%s216 + $0xa8] sm:$0xff] %v1739
        %1804 = vst [vmem:[%s216 + $0xb0] sm:$0xff] %v1740
        %1805 = vst [vmem:[%s216 + $0xb8] sm:$0xff] %v1741
        %1806 = vst [vmem:[%s216 + $0xc0] sm:$0xff] %v1742
        %1807 = vst [vmem:[%s216 + $0xc8] sm:$0xff] %v1743
        %1808 = vst [vmem:[%s216 + $0xd0] sm:$0xff] %v1744
        %1809 = vst [vmem:[%s216 + $0xd8] sm:$0xff] %v1745
        %1810 = vst [vmem:[%s216 + $0xe0] sm:$0xff] %v1746
        %1811 = vst [vmem:[%s216 + $0xe8] sm:$0xff] %v1747
        %1812 = vst [vmem:[%s216 + $0xf0] sm:$0xff] %v1748
        %1813 = vst [vmem:[%s216 + $0xf8] sm:$0xff] %v1749
        %1814 = vst [vmem:[%s216 + $0x100] sm:$0xff] %v1750
        %1815 = vst [vmem:[%s216 + $0x108] sm:$0xff] %v1751
        %1816 = vst [vmem:[%s216 + $0x110] sm:$0xff] %v1752
        %1817 = vst [vmem:[%s216 + $0x118] sm:$0xff] %v1753
        %1818 = vst [vmem:[%s216 + $0x120] sm:$0xff] %v1754
        %1819 = vst [vmem:[%s216 + $0x128] sm:$0xff] %v1755
        %1820 = vst [vmem:[%s216 + $0x130] sm:$0xff] %v1756
        %1821 = vst [vmem:[%s216 + $0x138] sm:$0xff] %v1757
        %1822 = vst [vmem:[%s216 + $0x140] sm:$0xff] %v1758
        %1823 = vst [vmem:[%s216 + $0x148] sm:$0xff] %v1759
        %1824 = vst [vmem:[%s216 + $0x150] sm:$0xff] %v1760
        %1825 = vst [vmem:[%s216 + $0x158] sm:$0xff] %v1761
        %1826 = vst [vmem:[%s216 + $0x160] sm:$0xff] %v1762
        %1827 = vst [vmem:[%s216 + $0x168] sm:$0xff] %v1763
        %1828 = vst [vmem:[%s216 + $0x170] sm:$0xff] %v1764
        %1829 = vst [vmem:[%s216 + $0x178] sm:$0xff] %v1765
        %1830 = vst [vmem:[%s216 + $0x180] sm:$0xff] %v1766
        %1831 = vst [vmem:[%s216 + $0x188] sm:$0xff] %v1767
        %1832 = vst [vmem:[%s216 + $0x190] sm:$0xff] %v1768
        %1833 = vst [vmem:[%s216 + $0x198] sm:$0xff] %v1769
        %1834 = vst [vmem:[%s216 + $0x1a0] sm:$0xff] %v1770
        %1835 = vst [vmem:[%s216 + $0x1a8] sm:$0xff] %v1771
        %1836 = vst [vmem:[%s216 + $0x1b0] sm:$0xff] %v1772
        %1837 = vst [vmem:[%s216 + $0x1b8] sm:$0xff] %v1773
        %1838 = vst [vmem:[%s216 + $0x1c0] sm:$0xff] %v1774
        %1839 = vst [vmem:[%s216 + $0x1c8] sm:$0xff] %v1775
        %1840 = vst [vmem:[%s216 + $0x1d0] sm:$0xff] %v1776
        %1841 = vst [vmem:[%s216 + $0x1d8] sm:$0xff] %v1777
        %1842 = vst [vmem:[%s216 + $0x1e0] sm:$0xff] %v1778
        %1843 = vst [vmem:[%s216 + $0x1e8] sm:$0xff] %v1779
        %1844 = vst [vmem:[%s216 + $0x1f0] sm:$0xff] %v1780
        %1845 = vst [vmem:[%s216 + $0x1f8] sm:$0xff] %v1781
        %s1846 = sand.u32 %s97, 1
        %s1847 = scalar_lea.sflag [#allocation4], %s1846
        %s1848 = sand.u32 %s97, 1
        %s1849 = smul.addr %s1848, 512
        %s1850 = scalar_lea.vmem [#allocation8], %s1849
        // Predicated region
        $region45: #{tpu_custom_call.1} parent=31 // pred_check
          %p1851 = pneg %p107
        $region46: #{tpu_custom_call.1} parent=31 // pred_check_branch
          %1853 = sbr.rel (%p1851) target = $region48
        $region47: #{tpu_custom_call.1} parent=31 // pred_region
          %s1854 = smul.u32 32, %s21
          %s1856 = ssub.s32 8192, 8192
          %1857 = vsyncadd %s1847, %s1856
          %s1858 = smul.addr %s1854, 2
          %s1859 = smul.addr %s1858, 128
          %s1860 = scalar_lea.hbm %s3, %s1859
          %s1861 = sshll.u32 %s1850, 4
          %s1862 = int_to_ptr.vmem [resolvable:$true] %s1861
          %1867 = dma.vmem_to_hbm [thread:$0]  %s1862, 8192, %s1860, %s1847, 256, 256, 16
        $region48: #{tpu_custom_call.1} parent=31 // pred_fallthru
          _
      $region32: #{tpu_custom_call.1} parent=5 // pred_fallthru
        _
      %p1868 = scmp.le.s32.totalorder 2, %s16
      // Predicated region
      $region49: #{tpu_custom_call.1} parent=5 // pred_check
        %p1869 = pneg %p1868
      $region50: #{tpu_custom_call.1} parent=5 // pred_check_branch
        %1871 = sbr.rel (%p1869) target = $region52
      $region51: #{tpu_custom_call.1} parent=5 // pred_region
        %s1872 = ssub.s32 %s16, 2
        // Predicated region
        $region53: #{tpu_custom_call.1} parent=51 // pred_check
          %p1873 = pneg %p113
        $region54: #{tpu_custom_call.1} parent=51 // pred_check_branch
          %1875 = sbr.rel (%p1873) target = $region56
        $region55: #{tpu_custom_call.1} parent=51 // pred_region
          %s1876 = sand.u32 %s98, 1
          %s1877 = scalar_lea.sflag [#allocation4], %s1876
          %s1878 = sand.u32 %s98, 1
          %s1879 = smul.addr %s1878, 512
          %s1880 = scalar_lea.vmem [#allocation8], %s1879
          %1881 = dma.done %s1877, 8192
        $region56: #{tpu_custom_call.1} parent=51 // pred_fallthru
          _
      $region52: #{tpu_custom_call.1} parent=5 // pred_fallthru
        _
    $region6: #{tpu_custom_call.1} parent=1 // loop_footer
      %s20 = sadd.s32 1, %s16
    $region7: #{tpu_custom_call.1} parent=1 // loop_footer_branch
      %15 = sbr.rel target = $region3
    $region8: #{tpu_custom_call.1} parent=1 // loop_exit
      _
    %1882 = vsyncpa [#allocation3], 1
    %s1883 = scalar_lea.sflag [#allocation3], 1
    %1884 = vsyncpa %s1883, 1
    %1885 = vsyncpa [#allocation6], 1
    %1886 = vsyncpa [#allocation4], 1
    %s1887 = scalar_lea.sflag [#allocation4], 1
    %1888 = vsyncpa %s1887, 1

</llo_original>
